<compile_context>
chip_gen: v5e
topology: v5e:2x2
jax: 0.10.0
libtpu: 0.0.40
codegen_flags: <defaults>
</compile_context>

<pallas_src>
import jax
import jax.numpy as jnp
from jax.experimental import pallas as pl
from jax.experimental.pallas import tpu as pltpu

# PyTorch Generator layer widths.
DIMS = [75, 128, 256, 256, 128, 128, 75]
NUM_LAYERS = len(DIMS) - 1  # 6 Linear layers

# Lane-padded widths: the 75-wide input/output dims are zero-padded to 128.
PAD = 128
PDIMS = [PAD] + DIMS[1:-1] + [PAD]


def _generator_kernel(x_ref,
                      w1, b1, w2, b2, w3, b3, w4, b4, w5, b5, w6, b6,
                      o_ref):
    """Full MLP forward for one batch tile, entirely in VMEM.

    Activations/weights are bf16 (MXU-native); accumulation, bias add and
    ReLU are done in f32. Dropout(0.5) is identity in eval mode.
    """

    def linear(h, w_ref, b_ref):
        # bf16 x bf16 -> f32 accumulate on the MXU, f32 bias add on the VPU.
        return jnp.dot(h, w_ref[...], preferred_element_type=jnp.float32) + b_ref[...]

    def relu_bf16(a):
        return jnp.maximum(a, 0.0).astype(jnp.bfloat16)

    h = x_ref[...]                        # (tile, 128) bf16 (cols 75: are zero)
    h = relu_bf16(linear(h, w1, b1))      # Linear(75->128)  + ReLU
    h = relu_bf16(linear(h, w2, b2))      # Linear(128->256) + ReLU
    # Dropout(0.5): identity at inference.
    h = relu_bf16(linear(h, w3, b3))      # Linear(256->256) + ReLU
    h = relu_bf16(linear(h, w4, b4))      # Linear(256->128) + ReLU
    # Dropout(0.5): identity at inference.
    h = relu_bf16(linear(h, w5, b5))      # Linear(128->128) + ReLU
    out = linear(h, w6, b6)               # Linear(128->75), zero-padded to 128
    o_ref[...] = out.astype(o_ref.dtype)


def generator_forward(x, params, *, batch_tile=256):
    """x: (B, 75) float32.  params: list of (W (in,out) f32, b (1,out) f32)."""
    B, D_in = x.shape
    assert D_in == DIMS[0]

    # Pad batch up to a multiple of batch_tile, and lanes to 128 (zeros).
    B_pad = ((B + batch_tile - 1) // batch_tile) * batch_tile
    x_p = jnp.zeros((B_pad, PAD), jnp.bfloat16)
    x_p = x_p.at[:B, :D_in].set(x.astype(jnp.bfloat16))

    # Weights cast to bf16 and zero-padded to lane-128 where needed; biases
    # stay f32 (added on the f32 accumulator).
    flat_params = []
    in_specs = [pl.BlockSpec((batch_tile, PAD), lambda i: (i, 0))]
    for li, (w, b) in enumerate(params):
        pin, pout = PDIMS[li], PDIMS[li + 1]
        w_p = jnp.zeros((pin, pout), jnp.bfloat16)
        w_p = w_p.at[:w.shape[0], :w.shape[1]].set(w.astype(jnp.bfloat16))
        b_p = jnp.zeros((1, pout), jnp.float32)
        b_p = b_p.at[:, :b.shape[1]].set(b.astype(jnp.float32))
        flat_params.extend([w_p, b_p])
        # Grid-invariant blocks: same block index every step, so Pallas does
        # not re-DMA them across grid iterations.
        in_specs.append(pl.BlockSpec((pin, pout), lambda i: (0, 0)))
        in_specs.append(pl.BlockSpec((1, pout), lambda i: (0, 0)))

    out_spec = pl.BlockSpec((batch_tile, PAD), lambda i: (i, 0))

    weight_elems = sum(PDIMS[i] * PDIMS[i + 1] for i in range(NUM_LAYERS))
    bias_elems = sum(PDIMS[i + 1] for i in range(NUM_LAYERS))
    cost = pl.CostEstimate(
        flops=2 * B_pad * weight_elems,
        transcendentals=0,
        bytes_accessed=(B_pad * PAD * 2          # x (bf16)
                        + B_pad * PAD * 4        # out (f32)
                        + weight_elems * 2       # weights (bf16)
                        + bias_elems * 4))       # biases (f32)

    out = pl.pallas_call(
        _generator_kernel,
        out_shape=jax.ShapeDtypeStruct((B_pad, PAD), jnp.float32),
        grid_spec=pltpu.PrefetchScalarGridSpec(
            num_scalar_prefetch=0,
            grid=(B_pad // batch_tile,),
            in_specs=in_specs,
            out_specs=out_spec,
        ),
        compiler_params=pltpu.CompilerParams(
            dimension_semantics=("parallel",),
            vmem_limit_bytes=32 * 1024 * 1024,  # guardrail; footprint is ~1 MiB
        ),
        cost_estimate=cost,
    )(x_p, *flat_params)

    # Strip batch padding and lane padding back to the module's (B, 75).
    return out[:B, :DIMS[-1]]


def init_params(key):
    """Deterministic init mimicking PyTorch's default Linear init:
    U(-1/sqrt(fan_in), 1/sqrt(fan_in)) for both weight and bias."""
    params = []
    for li in range(NUM_LAYERS):
        fan_in, fan_out = DIMS[li], DIMS[li + 1]
        key, kw, kb = jax.random.split(key, 3)
        bound = 1.0 / jnp.sqrt(float(fan_in))
        w = jax.random.uniform(kw, (fan_in, fan_out), jnp.float32, -bound, bound)
        b = jax.random.uniform(kb, (1, fan_out), jnp.float32, -bound, bound)
        params.append((w, b))
    return params


def generator_reference(x, params):
    """Plain-JAX reference matching the kernel numerics (bf16 operands,
    f32 accumulate) of the PyTorch forward pass (Dropout = identity)."""
    h = x.astype(jnp.bfloat16)
    for li, (w, b) in enumerate(params):
        h = jnp.dot(h, w.astype(jnp.bfloat16),
                    preferred_element_type=jnp.float32) + b
        if li < NUM_LAYERS - 1:
            h = jnp.maximum(h, 0.0).astype(jnp.bfloat16)
    return h  # f32, shape (B, 75)


if __name__ == "__main__":
    key = jax.random.PRNGKey(0)
    key, kx = jax.random.split(key)

    BATCH_TILE = 256
    B = 2 * BATCH_TILE  # 2-step grid: exercises tiled indexing, uses both v7x TCs
    x = jax.random.normal(kx, (B, DIMS[0]), jnp.float32)

    params = init_params(key)

    out = generator_forward(x, params, batch_tile=BATCH_TILE)
    out = jax.block_until_ready(out)

    ref = generator_reference(x, params)
    assert out.shape == (B, DIMS[-1]), out.shape
    assert jnp.allclose(out, ref, atol=2e-2, rtol=2e-2), "mismatch vs reference"

    print("KERNEL_OK")
</pallas_src>

<mosaic_0001>
module attributes {stable_mosaic.version = 11 : i64} {
  func.func @_generator_kernel(%arg0: i32, %arg1: memref<256x128xbf16, #tpu.memory_space<vmem>>, %arg2: memref<128x128xbf16, #tpu.memory_space<vmem>>, %arg3: memref<1x128xf32, #tpu.memory_space<vmem>>, %arg4: memref<128x256xbf16, #tpu.memory_space<vmem>>, %arg5: memref<1x256xf32, #tpu.memory_space<vmem>>, %arg6: memref<256x256xbf16, #tpu.memory_space<vmem>>, %arg7: memref<1x256xf32, #tpu.memory_space<vmem>>, %arg8: memref<256x128xbf16, #tpu.memory_space<vmem>>, %arg9: memref<1x128xf32, #tpu.memory_space<vmem>>, %arg10: memref<128x128xbf16, #tpu.memory_space<vmem>>, %arg11: memref<1x128xf32, #tpu.memory_space<vmem>>, %arg12: memref<128x128xbf16, #tpu.memory_space<vmem>>, %arg13: memref<1x128xf32, #tpu.memory_space<vmem>>, %arg14: memref<256x128xf32, #tpu.memory_space<vmem>>) attributes {dimension_semantics = [#tpu.dimension_semantics<parallel>], iteration_bounds = array<i64: 2>, scalar_prefetch = 0 : i64, scratch_operands = 0 : i64, tpu.core_type = #tpu.core_type<tc>, window_params = [{transform_indices = @transform_0, window_bounds = array<i64: 256, 128>}, {pipeline_mode = #tpu.pipeline_mode<synchronous>, transform_indices = @transform_1, window_bounds = array<i64: 128, 128>}, {pipeline_mode = #tpu.pipeline_mode<synchronous>, transform_indices = @transform_2, window_bounds = array<i64: 1, 128>}, {pipeline_mode = #tpu.pipeline_mode<synchronous>, transform_indices = @transform_3, window_bounds = array<i64: 128, 256>}, {pipeline_mode = #tpu.pipeline_mode<synchronous>, transform_indices = @transform_4, window_bounds = array<i64: 1, 256>}, {pipeline_mode = #tpu.pipeline_mode<synchronous>, transform_indices = @transform_5, window_bounds = array<i64: 256, 256>}, {pipeline_mode = #tpu.pipeline_mode<synchronous>, transform_indices = @transform_6, window_bounds = array<i64: 1, 256>}, {pipeline_mode = #tpu.pipeline_mode<synchronous>, transform_indices = @transform_7, window_bounds = array<i64: 256, 128>}, {pipeline_mode = #tpu.pipeline_mode<synchronous>, transform_indices = @transform_8, window_bounds = array<i64: 1, 128>}, {pipeline_mode = #tpu.pipeline_mode<synchronous>, transform_indices = @transform_9, window_bounds = array<i64: 128, 128>}, {pipeline_mode = #tpu.pipeline_mode<synchronous>, transform_indices = @transform_10, window_bounds = array<i64: 1, 128>}, {pipeline_mode = #tpu.pipeline_mode<synchronous>, transform_indices = @transform_11, window_bounds = array<i64: 128, 128>}, {pipeline_mode = #tpu.pipeline_mode<synchronous>, transform_indices = @transform_12, window_bounds = array<i64: 1, 128>}, {transform_indices = @transform_13, window_bounds = array<i64: 256, 128>}]} {
    %c0 = arith.constant 0 : index
    %c0_0 = arith.constant 0 : index
    %0 = vector.load %arg1[%c0, %c0_0] : memref<256x128xbf16, #tpu.memory_space<vmem>>, vector<256x128xbf16>
    %c0_1 = arith.constant 0 : index
    %c0_2 = arith.constant 0 : index
    %1 = vector.load %arg2[%c0_1, %c0_2] : memref<128x128xbf16, #tpu.memory_space<vmem>>, vector<128x128xbf16>
    %cst = arith.constant dense<0.000000e+00> : vector<256x128xf32>
    %2 = tpu.matmul %0, %1, %cst {dimension_numbers = #tpu.dot_dimension_numbers<[1], [0], [0], [1], [0, 0, 1, 1], [], []>} : vector<256x128xbf16>, vector<128x128xbf16>, vector<256x128xf32> -> vector<256x128xf32>
    %c0_3 = arith.constant 0 : index
    %c0_4 = arith.constant 0 : index
    %3 = vector.load %arg3[%c0_3, %c0_4] : memref<1x128xf32, #tpu.memory_space<vmem>>, vector<1x128xf32>
    %4 = vector.broadcast %3 : vector<1x128xf32> to vector<256x128xf32>
    %5 = arith.addf %2, %4 : vector<256x128xf32>
    %cst_5 = arith.constant 0.000000e+00 : f32
    %6 = vector.broadcast %cst_5 : f32 to vector<256x128xf32>
    %7 = arith.maximumf %5, %6 : vector<256x128xf32>
    %8 = arith.truncf %7 : vector<256x128xf32> to vector<256x128xbf16>
    %c0_6 = arith.constant 0 : index
    %c0_7 = arith.constant 0 : index
    %9 = vector.load %arg4[%c0_6, %c0_7] : memref<128x256xbf16, #tpu.memory_space<vmem>>, vector<128x256xbf16>
    %cst_8 = arith.constant dense<0.000000e+00> : vector<256x256xf32>
    %10 = tpu.matmul %8, %9, %cst_8 {dimension_numbers = #tpu.dot_dimension_numbers<[1], [0], [0], [1], [0, 0, 1, 1], [], []>} : vector<256x128xbf16>, vector<128x256xbf16>, vector<256x256xf32> -> vector<256x256xf32>
    %c0_9 = arith.constant 0 : index
    %c0_10 = arith.constant 0 : index
    %11 = vector.load %arg5[%c0_9, %c0_10] : memref<1x256xf32, #tpu.memory_space<vmem>>, vector<1x256xf32>
    %12 = vector.broadcast %11 : vector<1x256xf32> to vector<256x256xf32>
    %13 = arith.addf %10, %12 : vector<256x256xf32>
    %cst_11 = arith.constant 0.000000e+00 : f32
    %14 = vector.broadcast %cst_11 : f32 to vector<256x256xf32>
    %15 = arith.maximumf %13, %14 : vector<256x256xf32>
    %16 = arith.truncf %15 : vector<256x256xf32> to vector<256x256xbf16>
    %c0_12 = arith.constant 0 : index
    %c0_13 = arith.constant 0 : index
    %17 = vector.load %arg6[%c0_12, %c0_13] : memref<256x256xbf16, #tpu.memory_space<vmem>>, vector<256x256xbf16>
    %cst_14 = arith.constant dense<0.000000e+00> : vector<256x256xf32>
    %18 = tpu.matmul %16, %17, %cst_14 {dimension_numbers = #tpu.dot_dimension_numbers<[1], [0], [0], [1], [0, 0, 1, 1], [], []>} : vector<256x256xbf16>, vector<256x256xbf16>, vector<256x256xf32> -> vector<256x256xf32>
    %c0_15 = arith.constant 0 : index
    %c0_16 = arith.constant 0 : index
    %19 = vector.load %arg7[%c0_15, %c0_16] : memref<1x256xf32, #tpu.memory_space<vmem>>, vector<1x256xf32>
    %20 = vector.broadcast %19 : vector<1x256xf32> to vector<256x256xf32>
    %21 = arith.addf %18, %20 : vector<256x256xf32>
    %cst_17 = arith.constant 0.000000e+00 : f32
    %22 = vector.broadcast %cst_17 : f32 to vector<256x256xf32>
    %23 = arith.maximumf %21, %22 : vector<256x256xf32>
    %24 = arith.truncf %23 : vector<256x256xf32> to vector<256x256xbf16>
    %c0_18 = arith.constant 0 : index
    %c0_19 = arith.constant 0 : index
    %25 = vector.load %arg8[%c0_18, %c0_19] : memref<256x128xbf16, #tpu.memory_space<vmem>>, vector<256x128xbf16>
    %cst_20 = arith.constant dense<0.000000e+00> : vector<256x128xf32>
    %26 = tpu.matmul %24, %25, %cst_20 {dimension_numbers = #tpu.dot_dimension_numbers<[1], [0], [0], [1], [0, 0, 1, 1], [], []>} : vector<256x256xbf16>, vector<256x128xbf16>, vector<256x128xf32> -> vector<256x128xf32>
    %c0_21 = arith.constant 0 : index
    %c0_22 = arith.constant 0 : index
    %27 = vector.load %arg9[%c0_21, %c0_22] : memref<1x128xf32, #tpu.memory_space<vmem>>, vector<1x128xf32>
    %28 = vector.broadcast %27 : vector<1x128xf32> to vector<256x128xf32>
    %29 = arith.addf %26, %28 : vector<256x128xf32>
    %cst_23 = arith.constant 0.000000e+00 : f32
    %30 = vector.broadcast %cst_23 : f32 to vector<256x128xf32>
    %31 = arith.maximumf %29, %30 : vector<256x128xf32>
    %32 = arith.truncf %31 : vector<256x128xf32> to vector<256x128xbf16>
    %c0_24 = arith.constant 0 : index
    %c0_25 = arith.constant 0 : index
    %33 = vector.load %arg10[%c0_24, %c0_25] : memref<128x128xbf16, #tpu.memory_space<vmem>>, vector<128x128xbf16>
    %cst_26 = arith.constant dense<0.000000e+00> : vector<256x128xf32>
    %34 = tpu.matmul %32, %33, %cst_26 {dimension_numbers = #tpu.dot_dimension_numbers<[1], [0], [0], [1], [0, 0, 1, 1], [], []>} : vector<256x128xbf16>, vector<128x128xbf16>, vector<256x128xf32> -> vector<256x128xf32>
    %c0_27 = arith.constant 0 : index
    %c0_28 = arith.constant 0 : index
    %35 = vector.load %arg11[%c0_27, %c0_28] : memref<1x128xf32, #tpu.memory_space<vmem>>, vector<1x128xf32>
    %36 = vector.broadcast %35 : vector<1x128xf32> to vector<256x128xf32>
    %37 = arith.addf %34, %36 : vector<256x128xf32>
    %cst_29 = arith.constant 0.000000e+00 : f32
    %38 = vector.broadcast %cst_29 : f32 to vector<256x128xf32>
    %39 = arith.maximumf %37, %38 : vector<256x128xf32>
    %40 = arith.truncf %39 : vector<256x128xf32> to vector<256x128xbf16>
    %c0_30 = arith.constant 0 : index
    %c0_31 = arith.constant 0 : index
    %41 = vector.load %arg12[%c0_30, %c0_31] : memref<128x128xbf16, #tpu.memory_space<vmem>>, vector<128x128xbf16>
    %cst_32 = arith.constant dense<0.000000e+00> : vector<256x128xf32>
    %42 = tpu.matmul %40, %41, %cst_32 {dimension_numbers = #tpu.dot_dimension_numbers<[1], [0], [0], [1], [0, 0, 1, 1], [], []>} : vector<256x128xbf16>, vector<128x128xbf16>, vector<256x128xf32> -> vector<256x128xf32>
    %c0_33 = arith.constant 0 : index
    %c0_34 = arith.constant 0 : index
    %43 = vector.load %arg13[%c0_33, %c0_34] : memref<1x128xf32, #tpu.memory_space<vmem>>, vector<1x128xf32>
    %44 = vector.broadcast %43 : vector<1x128xf32> to vector<256x128xf32>
    %45 = arith.addf %42, %44 : vector<256x128xf32>
    %c0_35 = arith.constant 0 : index
    %c0_36 = arith.constant 0 : index
    %46 = vector.load %arg14[%c0_35, %c0_36] : memref<256x128xf32, #tpu.memory_space<vmem>>, vector<256x128xf32>
    tpu.vector_store %arg14[%c0_35, %c0_36], %45 {strides = array<i32>} : memref<256x128xf32, #tpu.memory_space<vmem>>, vector<256x128xf32>,
    return
  }
  func.func @transform_0(%arg0: i32) -> (i32, i32) {
    %c0_i32 = arith.constant 0 : i32
    %c0_i32_0 = arith.constant 0 : i32
    return %arg0, %c0_i32 : i32, i32
  }
  func.func @transform_1(%arg0: i32) -> (i32, i32) {
    %c0_i32 = arith.constant 0 : i32
    %c0_i32_0 = arith.constant 0 : i32
    %c0_i32_1 = arith.constant 0 : i32
    return %c0_i32, %c0_i32_0 : i32, i32
  }
  func.func @transform_2(%arg0: i32) -> (i32, i32) {
    %c0_i32 = arith.constant 0 : i32
    %c0_i32_0 = arith.constant 0 : i32
    %c0_i32_1 = arith.constant 0 : i32
    return %c0_i32, %c0_i32_0 : i32, i32
  }
  func.func @transform_3(%arg0: i32) -> (i32, i32) {
    %c0_i32 = arith.constant 0 : i32
    %c0_i32_0 = arith.constant 0 : i32
    %c0_i32_1 = arith.constant 0 : i32
    return %c0_i32, %c0_i32_0 : i32, i32
  }
  func.func @transform_4(%arg0: i32) -> (i32, i32) {
    %c0_i32 = arith.constant 0 : i32
    %c0_i32_0 = arith.constant 0 : i32
    %c0_i32_1 = arith.constant 0 : i32
    return %c0_i32, %c0_i32_0 : i32, i32
  }
  func.func @transform_5(%arg0: i32) -> (i32, i32) {
    %c0_i32 = arith.constant 0 : i32
    %c0_i32_0 = arith.constant 0 : i32
    %c0_i32_1 = arith.constant 0 : i32
    return %c0_i32, %c0_i32_0 : i32, i32
  }
  func.func @transform_6(%arg0: i32) -> (i32, i32) {
    %c0_i32 = arith.constant 0 : i32
    %c0_i32_0 = arith.constant 0 : i32
    %c0_i32_1 = arith.constant 0 : i32
    return %c0_i32, %c0_i32_0 : i32, i32
  }
  func.func @transform_7(%arg0: i32) -> (i32, i32) {
    %c0_i32 = arith.constant 0 : i32
    %c0_i32_0 = arith.constant 0 : i32
    %c0_i32_1 = arith.constant 0 : i32
    return %c0_i32, %c0_i32_0 : i32, i32
  }
  func.func @transform_8(%arg0: i32) -> (i32, i32) {
    %c0_i32 = arith.constant 0 : i32
    %c0_i32_0 = arith.constant 0 : i32
    %c0_i32_1 = arith.constant 0 : i32
    return %c0_i32, %c0_i32_0 : i32, i32
  }
  func.func @transform_9(%arg0: i32) -> (i32, i32) {
    %c0_i32 = arith.constant 0 : i32
    %c0_i32_0 = arith.constant 0 : i32
    %c0_i32_1 = arith.constant 0 : i32
    return %c0_i32, %c0_i32_0 : i32, i32
  }
  func.func @transform_10(%arg0: i32) -> (i32, i32) {
    %c0_i32 = arith.constant 0 : i32
    %c0_i32_0 = arith.constant 0 : i32
    %c0_i32_1 = arith.constant 0 : i32
    return %c0_i32, %c0_i32_0 : i32, i32
  }
  func.func @transform_11(%arg0: i32) -> (i32, i32) {
    %c0_i32 = arith.constant 0 : i32
    %c0_i32_0 = arith.constant 0 : i32
    %c0_i32_1 = arith.constant 0 : i32
    return %c0_i32, %c0_i32_0 : i32, i32
  }
  func.func @transform_12(%arg0: i32) -> (i32, i32) {
    %c0_i32 = arith.constant 0 : i32
    %c0_i32_0 = arith.constant 0 : i32
    %c0_i32_1 = arith.constant 0 : i32
    return %c0_i32, %c0_i32_0 : i32, i32
  }
  func.func @transform_13(%arg0: i32) -> (i32, i32) {
    %c0_i32 = arith.constant 0 : i32
    %c0_i32_0 = arith.constant 0 : i32
    return %arg0, %c0_i32 : i32, i32
  }
}

</mosaic_0001>

<llo_original>
// kernel: tpu_custom_call.1
$region0: #{tpu_custom_call.1}
  #allocation0 [shape = 'u32[]', space=smem, size = 0x4, offset = 0x4, fixed_abs, tag = 'smem constant byte address 0x4 - core index']
  #allocation1 [shape = 'u32[72,128]{1,0:T(1,128)}', space=vmem, size = 0x9000, scoped, tag = 'internal scratch']
  %s0 = inlined_call_operand.hbm [shape: bf16[512,128], index: 0, kind: input, shape index: {}]
  %s1 = inlined_call_operand.hbm [shape: bf16[128,128], index: 1, kind: input, shape index: {}]
  %s2 = inlined_call_operand.hbm [shape: f32[1,128], index: 2, kind: input, shape index: {}]
  %s3 = inlined_call_operand.hbm [shape: bf16[128,256], index: 3, kind: input, shape index: {}]
  %s4 = inlined_call_operand.vmem [shape: f32[1,256], index: 4, kind: input, shape index: {}]
  %s5 = inlined_call_operand.hbm [shape: bf16[256,256], index: 5, kind: input, shape index: {}]
  %s6 = inlined_call_operand.vmem [shape: f32[1,256], index: 6, kind: input, shape index: {}]
  %s7 = inlined_call_operand.hbm [shape: bf16[256,128], index: 7, kind: input, shape index: {}]
  %s8 = inlined_call_operand.vmem [shape: f32[1,128], index: 8, kind: input, shape index: {}]
  %s9 = inlined_call_operand.hbm [shape: bf16[128,128], index: 9, kind: input, shape index: {}]
  %s10 = inlined_call_operand.vmem [shape: f32[1,128], index: 10, kind: input, shape index: {}]
  %s11 = inlined_call_operand.hbm [shape: bf16[128,128], index: 11, kind: input, shape index: {}]
  %s12 = inlined_call_operand.vmem [shape: f32[1,128], index: 12, kind: input, shape index: {}]
  %s13 = inlined_call_operand.hbm [shape: f32[512,128], index: 13, kind: output, shape index: {}]
  %s14 = sld [smem:[#allocation0]]
  $region117: #{tpu_custom_call.1} parent=0
    _
  %s16 = ssub.s32 1, %s14
  %s17 = scalar_select 0, %s16, %s14
  $region1: #{tpu_custom_call.1} parent=0
    #allocation2 [shape = 'u8[131072]{0}', space=vmem, size = 0x20000, scoped, tag = 'input window, operand 0']
    #allocation3 [shape = 's32[2]{0}', space=sflag, size = 0x8, scoped, tag = 'scoped memory for tpu_custom_call.1']
    #allocation4 [shape = 's32[2]{0}', space=sflag, size = 0x8, scoped, tag = 'scoped memory for tpu_custom_call.1']
    #allocation5 [shape = 'u8[32768]{0}', space=vmem, size = 0x8000, scoped, tag = 'input window, operand 1, single buffered']
    #allocation6 [shape = 's32[1]{0}', space=sflag, size = 0x4, scoped, tag = 'scoped memory for tpu_custom_call.1']
    #allocation7 [shape = 'u8[512]{0}', space=vmem, size = 0x400, scoped, tag = 'input window, operand 2, single buffered']
    #allocation8 [shape = 'u8[65536]{0}', space=vmem, size = 0x10000, scoped, tag = 'input window, operand 3, single buffered']
    #allocation9 [shape = 's32[1]{0}', space=sflag, size = 0x4, scoped, tag = 'scoped memory for tpu_custom_call.1']
    #allocation10 [shape = 'u8[131072]{0}', space=vmem, size = 0x20000, scoped, tag = 'input window, operand 5, single buffered']
    #allocation11 [shape = 'u8[65536]{0}', space=vmem, size = 0x10000, scoped, tag = 'input window, operand 7, single buffered']
    #allocation12 [shape = 's32[1]{0}', space=sflag, size = 0x4, scoped, tag = 'scoped memory for tpu_custom_call.1']
    #allocation13 [shape = 'u8[32768]{0}', space=vmem, size = 0x8000, scoped, tag = 'input window, operand 9, single buffered']
    #allocation14 [shape = 'u8[32768]{0}', space=vmem, size = 0x8000, scoped, tag = 'input window, operand 11, single buffered']
    #allocation15 [shape = 's32[1]{0}', space=sflag, size = 0x4, scoped, tag = 'scoped memory for tpu_custom_call.1']
    #allocation16 [shape = 'u8[262144]{0}', space=vmem, size = 0x40000, scoped, tag = 'output window, operand 0']
    %18 = vsyncpa [#allocation3], 0
    %s19 = scalar_lea.sflag [#allocation3], 1
    %20 = vsyncpa %s19, 0
    %21 = vsyncpa [#allocation6], 0
    %22 = vsyncpa [#allocation9], 0
    %23 = vsyncpa [#allocation12], 0
    %24 = vsyncpa [#allocation15], 0
    %25 = vsyncpa [#allocation4], 0
    %s26 = scalar_lea.sflag [#allocation4], 1
    %27 = vsyncpa %s26, 0
    loop: start=0, step=1, limit=4
    $region2: #{tpu_custom_call.1} parent=1 // loop_pre_header
      _
    $region3: #{tpu_custom_call.1} parent=1 // loop_header
      %s29 = sphi 0, %s33
      %p30 = scmp.ge.s32.totalorder %s29, 4
      %s39 = sphi 0, %s41
      %s42 = sphi 0, %s39
      %s43 = sphi 0, %s42
      %s59 = sphi 0, %s43
      %s63 = sphi 0, %s63
      %s65 = sphi 0, %s63
      %s66 = sphi 0, %s65
      %s80 = sphi 0, %s66
      %s84 = sphi 0, %s84
      %s86 = sphi 0, %s84
      %s87 = sphi 0, %s86
      %s101 = sphi 0, %s87
      %s105 = sphi 0, %s105
      %s107 = sphi 0, %s105
      %s108 = sphi 0, %s107
      %s122 = sphi 0, %s108
      %s126 = sphi 0, %s126
      %s128 = sphi 0, %s126
      %s129 = sphi 0, %s128
      %s143 = sphi 0, %s129
      %s147 = sphi 0, %s147
      %s149 = sphi 0, %s147
      %s150 = sphi 0, %s149
      %s164 = sphi 0, %s150
      %s168 = sphi 0, %s168
      %s170 = sphi 0, %s168
      %s171 = sphi 0, %s170
      %s185 = sphi 0, %s171
      %s189 = sphi 0, %s189
      %s191 = sphi 0, %s189
      %s192 = sphi 0, %s191
      %s206 = sphi 0, %s192
      %s210 = sphi 0, %s210
      %s212 = sphi 0, %s210
      %s213 = sphi 0, %s212
      %s227 = sphi 0, %s213
      %s231 = sphi 0, %s231
      %s233 = sphi 0, %s231
      %s234 = sphi 0, %s233
      %s248 = sphi 0, %s234
      %s252 = sphi 0, %s252
      %s254 = sphi 0, %s252
      %s255 = sphi 0, %s254
      %s269 = sphi 0, %s255
      %s273 = sphi 0, %s273
      %s275 = sphi 0, %s273
      %s276 = sphi 0, %s275
      %s290 = sphi 0, %s276
      %s294 = sphi 0, %s294
      %s296 = sphi 0, %s294
      %s297 = sphi 0, %s296
      %s311 = sphi 0, %s297
      %s317 = sphi 0, %s319
      %s320 = sphi 0, %s317
      %s321 = sphi 0, %s320
      %s337 = sphi 0, %s321
    $region4: #{tpu_custom_call.1} parent=1 // loop_header_branch
      %32 = sbr.rel (%p30) target = $region8
    $region5: #{tpu_custom_call.1} parent=1 // loop_body
      %s34 = ssub.s32 %s29, 1
      %s35 = ssub.s32 %s29, 2
      %s36 = sadd.s32 %s29, 1
      %s37 = ssub.s32 %s29, %s36
      %p38 = scmp.eq.s32.totalorder %s37, 0
      %s40 = sadd.s32 %s39, 1
      %s41 = scalar_select %p38, %s39, %s40
      %p44 = pneg %p38
      %p45 = scmp.eq.s32.totalorder %s29, 1
      %p46 = por %p44, %p45
      %p47 = scmp.ne.s32.totalorder %s39, %s42
      %p48 = scmp.eq.s32.totalorder %s29, 0
      %p49 = por %p47, %p48
      %p50 = scmp.ne.s32.totalorder %s39, %s42
      %p51 = scmp.eq.s32.totalorder %s34, 1
      %p52 = por %p50, %p51
      %p53 = scmp.ne.s32.totalorder %s42, %s43
      %p54 = scmp.eq.s32.totalorder %s34, 0
      %p55 = por %p53, %p54
      %p56 = scmp.ne.s32.totalorder %s42, %s43
      %p57 = scmp.eq.s32.totalorder %s35, 1
      %p58 = por %p56, %p57
      %p60 = scmp.ne.s32.totalorder %s43, %s59
      %p61 = scmp.eq.s32.totalorder %s35, 0
      %p62 = por %p60, %p61
      %s64 = sadd.s32 %s63, 1
      %p67 = scmp.eq.s32.totalorder %s29, 1
      %p68 = scmp.ne.s32.totalorder %s63, %s65
      %p69 = scmp.eq.s32.totalorder %s29, 0
      %p70 = por %p68, %p69
      %p71 = scmp.ne.s32.totalorder %s63, %s65
      %p72 = scmp.eq.s32.totalorder %s34, 1
      %p73 = por %p71, %p72
      %p74 = scmp.ne.s32.totalorder %s65, %s66
      %p75 = scmp.eq.s32.totalorder %s34, 0
      %p76 = por %p74, %p75
      %p77 = scmp.ne.s32.totalorder %s65, %s66
      %p78 = scmp.eq.s32.totalorder %s35, 1
      %p79 = por %p77, %p78
      %p81 = scmp.ne.s32.totalorder %s66, %s80
      %p82 = scmp.eq.s32.totalorder %s35, 0
      %p83 = por %p81, %p82
      %s85 = sadd.s32 %s84, 1
      %p88 = scmp.eq.s32.totalorder %s29, 1
      %p89 = scmp.ne.s32.totalorder %s84, %s86
      %p90 = scmp.eq.s32.totalorder %s29, 0
      %p91 = por %p89, %p90
      %p92 = scmp.ne.s32.totalorder %s84, %s86
      %p93 = scmp.eq.s32.totalorder %s34, 1
      %p94 = por %p92, %p93
      %p95 = scmp.ne.s32.totalorder %s86, %s87
      %p96 = scmp.eq.s32.totalorder %s34, 0
      %p97 = por %p95, %p96
      %p98 = scmp.ne.s32.totalorder %s86, %s87
      %p99 = scmp.eq.s32.totalorder %s35, 1
      %p100 = por %p98, %p99
      %p102 = scmp.ne.s32.totalorder %s87, %s101
      %p103 = scmp.eq.s32.totalorder %s35, 0
      %p104 = por %p102, %p103
      %s106 = sadd.s32 %s105, 1
      %p109 = scmp.eq.s32.totalorder %s29, 1
      %p110 = scmp.ne.s32.totalorder %s105, %s107
      %p111 = scmp.eq.s32.totalorder %s29, 0
      %p112 = por %p110, %p111
      %p113 = scmp.ne.s32.totalorder %s105, %s107
      %p114 = scmp.eq.s32.totalorder %s34, 1
      %p115 = por %p113, %p114
      %p116 = scmp.ne.s32.totalorder %s107, %s108
      %p117 = scmp.eq.s32.totalorder %s34, 0
      %p118 = por %p116, %p117
      %p119 = scmp.ne.s32.totalorder %s107, %s108
      %p120 = scmp.eq.s32.totalorder %s35, 1
      %p121 = por %p119, %p120
      %p123 = scmp.ne.s32.totalorder %s108, %s122
      %p124 = scmp.eq.s32.totalorder %s35, 0
      %p125 = por %p123, %p124
      %s127 = sadd.s32 %s126, 1
      %p130 = scmp.eq.s32.totalorder %s29, 1
      %p131 = scmp.ne.s32.totalorder %s126, %s128
      %p132 = scmp.eq.s32.totalorder %s29, 0
      %p133 = por %p131, %p132
      %p134 = scmp.ne.s32.totalorder %s126, %s128
      %p135 = scmp.eq.s32.totalorder %s34, 1
      %p136 = por %p134, %p135
      %p137 = scmp.ne.s32.totalorder %s128, %s129
      %p138 = scmp.eq.s32.totalorder %s34, 0
      %p139 = por %p137, %p138
      %p140 = scmp.ne.s32.totalorder %s128, %s129
      %p141 = scmp.eq.s32.totalorder %s35, 1
      %p142 = por %p140, %p141
      %p144 = scmp.ne.s32.totalorder %s129, %s143
      %p145 = scmp.eq.s32.totalorder %s35, 0
      %p146 = por %p144, %p145
      %s148 = sadd.s32 %s147, 1
      %p151 = scmp.eq.s32.totalorder %s29, 1
      %p152 = scmp.ne.s32.totalorder %s147, %s149
      %p153 = scmp.eq.s32.totalorder %s29, 0
      %p154 = por %p152, %p153
      %p155 = scmp.ne.s32.totalorder %s147, %s149
      %p156 = scmp.eq.s32.totalorder %s34, 1
      %p157 = por %p155, %p156
      %p158 = scmp.ne.s32.totalorder %s149, %s150
      %p159 = scmp.eq.s32.totalorder %s34, 0
      %p160 = por %p158, %p159
      %p161 = scmp.ne.s32.totalorder %s149, %s150
      %p162 = scmp.eq.s32.totalorder %s35, 1
      %p163 = por %p161, %p162
      %p165 = scmp.ne.s32.totalorder %s150, %s164
      %p166 = scmp.eq.s32.totalorder %s35, 0
      %p167 = por %p165, %p166
      %s169 = sadd.s32 %s168, 1
      %p172 = scmp.eq.s32.totalorder %s29, 1
      %p173 = scmp.ne.s32.totalorder %s168, %s170
      %p174 = scmp.eq.s32.totalorder %s29, 0
      %p175 = por %p173, %p174
      %p176 = scmp.ne.s32.totalorder %s168, %s170
      %p177 = scmp.eq.s32.totalorder %s34, 1
      %p178 = por %p176, %p177
      %p179 = scmp.ne.s32.totalorder %s170, %s171
      %p180 = scmp.eq.s32.totalorder %s34, 0
      %p181 = por %p179, %p180
      %p182 = scmp.ne.s32.totalorder %s170, %s171
      %p183 = scmp.eq.s32.totalorder %s35, 1
      %p184 = por %p182, %p183
      %p186 = scmp.ne.s32.totalorder %s171, %s185
      %p187 = scmp.eq.s32.totalorder %s35, 0
      %p188 = por %p186, %p187
      %s190 = sadd.s32 %s189, 1
      %p193 = scmp.eq.s32.totalorder %s29, 1
      %p194 = scmp.ne.s32.totalorder %s189, %s191
      %p195 = scmp.eq.s32.totalorder %s29, 0
      %p196 = por %p194, %p195
      %p197 = scmp.ne.s32.totalorder %s189, %s191
      %p198 = scmp.eq.s32.totalorder %s34, 1
      %p199 = por %p197, %p198
      %p200 = scmp.ne.s32.totalorder %s191, %s192
      %p201 = scmp.eq.s32.totalorder %s34, 0
      %p202 = por %p200, %p201
      %p203 = scmp.ne.s32.totalorder %s191, %s192
      %p204 = scmp.eq.s32.totalorder %s35, 1
      %p205 = por %p203, %p204
      %p207 = scmp.ne.s32.totalorder %s192, %s206
      %p208 = scmp.eq.s32.totalorder %s35, 0
      %p209 = por %p207, %p208
      %s211 = sadd.s32 %s210, 1
      %p214 = scmp.eq.s32.totalorder %s29, 1
      %p215 = scmp.ne.s32.totalorder %s210, %s212
      %p216 = scmp.eq.s32.totalorder %s29, 0
      %p217 = por %p215, %p216
      %p218 = scmp.ne.s32.totalorder %s210, %s212
      %p219 = scmp.eq.s32.totalorder %s34, 1
      %p220 = por %p218, %p219
      %p221 = scmp.ne.s32.totalorder %s212, %s213
      %p222 = scmp.eq.s32.totalorder %s34, 0
      %p223 = por %p221, %p222
      %p224 = scmp.ne.s32.totalorder %s212, %s213
      %p225 = scmp.eq.s32.totalorder %s35, 1
      %p226 = por %p224, %p225
      %p228 = scmp.ne.s32.totalorder %s213, %s227
      %p229 = scmp.eq.s32.totalorder %s35, 0
      %p230 = por %p228, %p229
      %s232 = sadd.s32 %s231, 1
      %p235 = scmp.eq.s32.totalorder %s29, 1
      %p236 = scmp.ne.s32.totalorder %s231, %s233
      %p237 = scmp.eq.s32.totalorder %s29, 0
      %p238 = por %p236, %p237
      %p239 = scmp.ne.s32.totalorder %s231, %s233
      %p240 = scmp.eq.s32.totalorder %s34, 1
      %p241 = por %p239, %p240
      %p242 = scmp.ne.s32.totalorder %s233, %s234
      %p243 = scmp.eq.s32.totalorder %s34, 0
      %p244 = por %p242, %p243
      %p245 = scmp.ne.s32.totalorder %s233, %s234
      %p246 = scmp.eq.s32.totalorder %s35, 1
      %p247 = por %p245, %p246
      %p249 = scmp.ne.s32.totalorder %s234, %s248
      %p250 = scmp.eq.s32.totalorder %s35, 0
      %p251 = por %p249, %p250
      %s253 = sadd.s32 %s252, 1
      %p256 = scmp.eq.s32.totalorder %s29, 1
      %p257 = scmp.ne.s32.totalorder %s252, %s254
      %p258 = scmp.eq.s32.totalorder %s29, 0
      %p259 = por %p257, %p258
      %p260 = scmp.ne.s32.totalorder %s252, %s254
      %p261 = scmp.eq.s32.totalorder %s34, 1
      %p262 = por %p260, %p261
      %p263 = scmp.ne.s32.totalorder %s254, %s255
      %p264 = scmp.eq.s32.totalorder %s34, 0
      %p265 = por %p263, %p264
      %p266 = scmp.ne.s32.totalorder %s254, %s255
      %p267 = scmp.eq.s32.totalorder %s35, 1
      %p268 = por %p266, %p267
      %p270 = scmp.ne.s32.totalorder %s255, %s269
      %p271 = scmp.eq.s32.totalorder %s35, 0
      %p272 = por %p270, %p271
      %s274 = sadd.s32 %s273, 1
      %p277 = scmp.eq.s32.totalorder %s29, 1
      %p278 = scmp.ne.s32.totalorder %s273, %s275
      %p279 = scmp.eq.s32.totalorder %s29, 0
      %p280 = por %p278, %p279
      %p281 = scmp.ne.s32.totalorder %s273, %s275
      %p282 = scmp.eq.s32.totalorder %s34, 1
      %p283 = por %p281, %p282
      %p284 = scmp.ne.s32.totalorder %s275, %s276
      %p285 = scmp.eq.s32.totalorder %s34, 0
      %p286 = por %p284, %p285
      %p287 = scmp.ne.s32.totalorder %s275, %s276
      %p288 = scmp.eq.s32.totalorder %s35, 1
      %p289 = por %p287, %p288
      %p291 = scmp.ne.s32.totalorder %s276, %s290
      %p292 = scmp.eq.s32.totalorder %s35, 0
      %p293 = por %p291, %p292
      %s295 = sadd.s32 %s294, 1
      %p298 = scmp.eq.s32.totalorder %s29, 1
      %p299 = scmp.ne.s32.totalorder %s294, %s296
      %p300 = scmp.eq.s32.totalorder %s29, 0
      %p301 = por %p299, %p300
      %p302 = scmp.ne.s32.totalorder %s294, %s296
      %p303 = scmp.eq.s32.totalorder %s34, 1
      %p304 = por %p302, %p303
      %p305 = scmp.ne.s32.totalorder %s296, %s297
      %p306 = scmp.eq.s32.totalorder %s34, 0
      %p307 = por %p305, %p306
      %p308 = scmp.ne.s32.totalorder %s296, %s297
      %p309 = scmp.eq.s32.totalorder %s35, 1
      %p310 = por %p308, %p309
      %p312 = scmp.ne.s32.totalorder %s297, %s311
      %p313 = scmp.eq.s32.totalorder %s35, 0
      %p314 = por %p312, %p313
      %s315 = ssub.s32 %s29, %s36
      %p316 = scmp.eq.s32.totalorder %s315, 0
      %s318 = sadd.s32 %s317, 1
      %s319 = scalar_select %p316, %s317, %s318
      %p322 = pneg %p316
      %p323 = scmp.eq.s32.totalorder %s29, 1
      %p324 = por %p322, %p323
      %p325 = scmp.ne.s32.totalorder %s317, %s320
      %p326 = scmp.eq.s32.totalorder %s29, 0
      %p327 = por %p325, %p326
      %p328 = scmp.ne.s32.totalorder %s317, %s320
      %p329 = scmp.eq.s32.totalorder %s34, 1
      %p330 = por %p328, %p329
      %p331 = scmp.ne.s32.totalorder %s320, %s321
      %p332 = scmp.eq.s32.totalorder %s34, 0
      %p333 = por %p331, %p332
      %p334 = scmp.ne.s32.totalorder %s320, %s321
      %p335 = scmp.eq.s32.totalorder %s35, 1
      %p336 = por %p334, %p335
      %p338 = scmp.ne.s32.totalorder %s321, %s337
      %p339 = scmp.eq.s32.totalorder %s35, 0
      %p340 = por %p338, %p339
      %p341 = scmp.le.s32.totalorder 1, %s29
      %p342 = scmp.lt.s32.totalorder %s29, 3
      %p343 = pnand %p341, %p342
      %p344 = pneg %p343
      // Predicated region
      $region9: #{tpu_custom_call.1} parent=5 // pred_check
        _
      $region10: #{tpu_custom_call.1} parent=5 // pred_check_branch
        %346 = sbr.rel (%p343) target = $region12
      $region11: #{tpu_custom_call.1} parent=5 // pred_region
        %s347 = ssub.s32 %s29, 1
        // Predicated region
        $region13: #{tpu_custom_call.1} parent=11 // pred_check
          %p348 = pneg %p76
        $region14: #{tpu_custom_call.1} parent=11 // pred_check_branch
          %350 = sbr.rel (%p348) target = $region16
        $region15: #{tpu_custom_call.1} parent=11 // pred_region
          %352 = vsyncadd [#allocation6], 0
          %s353 = sshll.u32 %s1, 4
          %s354 = int_to_ptr.hbm [resolvable:$true] %s353
          %s355 = sshll.u32 [#allocation5], 4
          %s356 = int_to_ptr.vmem [resolvable:$true] %s355
          %361 = dma.hbm_to_vmem [thread:$0]  %s354, 1024, %s356, [#allocation6], 64, 64, 4
        $region16: #{tpu_custom_call.1} parent=11 // pred_fallthru
          _
        // Predicated region
        $region17: #{tpu_custom_call.1} parent=11 // pred_check
          %p362 = pneg %p97
        $region18: #{tpu_custom_call.1} parent=11 // pred_check_branch
          %364 = sbr.rel (%p362) target = $region20
        $region19: #{tpu_custom_call.1} parent=11 // pred_region
          %366 = vsyncadd [#allocation6], 0
          %s368 = sshll.u32 %s2, 4
          %s369 = int_to_ptr.hbm [resolvable:$true] %s368
          %s370 = sshll.u32 [#allocation7], 4
          %s371 = int_to_ptr.vmem [resolvable:$true] %s370
          %373 = dma.hbm_to_vmem [thread:$0]  %s369, 16, %s371, [#allocation6]
        $region20: #{tpu_custom_call.1} parent=11 // pred_fallthru
          _
        // Predicated region
        $region21: #{tpu_custom_call.1} parent=11 // pred_check
          %p374 = pneg %p118
        $region22: #{tpu_custom_call.1} parent=11 // pred_check_branch
          %376 = sbr.rel (%p374) target = $region24
        $region23: #{tpu_custom_call.1} parent=11 // pred_region
          %378 = vsyncadd [#allocation9], 0
          %s379 = sshll.u32 %s3, 4
          %s380 = int_to_ptr.hbm [resolvable:$true] %s379
          %s381 = sshll.u32 [#allocation8], 4
          %s382 = int_to_ptr.vmem [resolvable:$true] %s381
          %387 = dma.hbm_to_vmem [thread:$0]  %s380, 2048, %s382, [#allocation9], 128, 128, 8
        $region24: #{tpu_custom_call.1} parent=11 // pred_fallthru
          _
        // Predicated region
        $region25: #{tpu_custom_call.1} parent=11 // pred_check
          %p388 = pneg %p139
        $region26: #{tpu_custom_call.1} parent=11 // pred_check_branch
          %390 = sbr.rel (%p388) target = $region28
        $region27: #{tpu_custom_call.1} parent=11 // pred_region
          _
        $region28: #{tpu_custom_call.1} parent=11 // pred_fallthru
          _
        // Predicated region
        $region29: #{tpu_custom_call.1} parent=11 // pred_check
          %p391 = pneg %p160
        $region30: #{tpu_custom_call.1} parent=11 // pred_check_branch
          %393 = sbr.rel (%p391) target = $region32
        $region31: #{tpu_custom_call.1} parent=11 // pred_region
          %395 = vsyncadd [#allocation9], 0
          %s396 = sshll.u32 %s5, 4
          %s397 = int_to_ptr.hbm [resolvable:$true] %s396
          %s398 = sshll.u32 [#allocation10], 4
          %s399 = int_to_ptr.vmem [resolvable:$true] %s398
          %404 = dma.hbm_to_vmem [thread:$0]  %s397, 4096, %s399, [#allocation9], 128, 128, 8
        $region32: #{tpu_custom_call.1} parent=11 // pred_fallthru
          _
        // Predicated region
        $region33: #{tpu_custom_call.1} parent=11 // pred_check
          %p405 = pneg %p181
        $region34: #{tpu_custom_call.1} parent=11 // pred_check_branch
          %407 = sbr.rel (%p405) target = $region36
        $region35: #{tpu_custom_call.1} parent=11 // pred_region
          _
        $region36: #{tpu_custom_call.1} parent=11 // pred_fallthru
          _
        // Predicated region
        $region37: #{tpu_custom_call.1} parent=11 // pred_check
          %p408 = pneg %p202
        $region38: #{tpu_custom_call.1} parent=11 // pred_check_branch
          %410 = sbr.rel (%p408) target = $region40
        $region39: #{tpu_custom_call.1} parent=11 // pred_region
          %412 = vsyncadd [#allocation12], 0
          %s413 = sshll.u32 %s7, 4
          %s414 = int_to_ptr.hbm [resolvable:$true] %s413
          %s415 = sshll.u32 [#allocation11], 4
          %s416 = int_to_ptr.vmem [resolvable:$true] %s415
          %421 = dma.hbm_to_vmem [thread:$0]  %s414, 2048, %s416, [#allocation12], 64, 64, 4
        $region40: #{tpu_custom_call.1} parent=11 // pred_fallthru
          _
        // Predicated region
        $region41: #{tpu_custom_call.1} parent=11 // pred_check
          %p422 = pneg %p223
        $region42: #{tpu_custom_call.1} parent=11 // pred_check_branch
          %424 = sbr.rel (%p422) target = $region44
        $region43: #{tpu_custom_call.1} parent=11 // pred_region
          _
        $region44: #{tpu_custom_call.1} parent=11 // pred_fallthru
          _
        // Predicated region
        $region45: #{tpu_custom_call.1} parent=11 // pred_check
          %p425 = pneg %p244
        $region46: #{tpu_custom_call.1} parent=11 // pred_check_branch
          %427 = sbr.rel (%p425) target = $region48
        $region47: #{tpu_custom_call.1} parent=11 // pred_region
          %429 = vsyncadd [#allocation12], 0
          %s430 = sshll.u32 %s9, 4
          %s431 = int_to_ptr.hbm [resolvable:$true] %s430
          %s432 = sshll.u32 [#allocation13], 4
          %s433 = int_to_ptr.vmem [resolvable:$true] %s432
          %438 = dma.hbm_to_vmem [thread:$0]  %s431, 1024, %s433, [#allocation12], 64, 64, 4
        $region48: #{tpu_custom_call.1} parent=11 // pred_fallthru
          _
        // Predicated region
        $region49: #{tpu_custom_call.1} parent=11 // pred_check
          %p439 = pneg %p265
        $region50: #{tpu_custom_call.1} parent=11 // pred_check_branch
          %441 = sbr.rel (%p439) target = $region52
        $region51: #{tpu_custom_call.1} parent=11 // pred_region
          _
        $region52: #{tpu_custom_call.1} parent=11 // pred_fallthru
          _
        // Predicated region
        $region53: #{tpu_custom_call.1} parent=11 // pred_check
          %p442 = pneg %p286
        $region54: #{tpu_custom_call.1} parent=11 // pred_check_branch
          %444 = sbr.rel (%p442) target = $region56
        $region55: #{tpu_custom_call.1} parent=11 // pred_region
          %446 = vsyncadd [#allocation15], 0
          %s447 = sshll.u32 %s11, 4
          %s448 = int_to_ptr.hbm [resolvable:$true] %s447
          %s449 = sshll.u32 [#allocation14], 4
          %s450 = int_to_ptr.vmem [resolvable:$true] %s449
          %455 = dma.hbm_to_vmem [thread:$0]  %s448, 1024, %s450, [#allocation15], 64, 64, 4
        $region56: #{tpu_custom_call.1} parent=11 // pred_fallthru
          _
        // Predicated region
        $region57: #{tpu_custom_call.1} parent=11 // pred_check
          %p456 = pneg %p307
        $region58: #{tpu_custom_call.1} parent=11 // pred_check_branch
          %458 = sbr.rel (%p456) target = $region60
        $region59: #{tpu_custom_call.1} parent=11 // pred_region
          _
        $region60: #{tpu_custom_call.1} parent=11 // pred_fallthru
          _
      $region12: #{tpu_custom_call.1} parent=5 // pred_fallthru
        _
      %p459 = scmp.lt.s32.totalorder %s29, 2
      // Predicated region
      $region61: #{tpu_custom_call.1} parent=5 // pred_check
        %p460 = pneg %p459
      $region62: #{tpu_custom_call.1} parent=5 // pred_check_branch
        %462 = sbr.rel (%p460) target = $region64
      $region63: #{tpu_custom_call.1} parent=5 // pred_region
        // Predicated region
        $region65: #{tpu_custom_call.1} parent=63 // pred_check
          %p463 = pneg %p49
        $region66: #{tpu_custom_call.1} parent=63 // pred_check_branch
          %465 = sbr.rel (%p463) target = $region68
        $region67: #{tpu_custom_call.1} parent=63 // pred_region
          %s466 = sand.u32 %s39, 1
          %s467 = scalar_lea.sflag [#allocation3], %s466
          %s468 = sand.u32 %s39, 1
          %s469 = smul.addr %s468, 128
          %s470 = scalar_lea.vmem [#allocation2], %s469
          %s471 = smul.u32 32, %s29
          %473 = vsyncadd %s467, 0
          %s474 = smul.addr %s471, 4
          %s475 = scalar_lea.hbm %s0, %s474
          %s476 = sshll.u32 %s475, 4
          %s477 = int_to_ptr.hbm [resolvable:$true] %s476
          %s478 = sshll.u32 %s470, 4
          %s479 = int_to_ptr.vmem [resolvable:$true] %s478
          %484 = dma.hbm_to_vmem [thread:$0]  %s477, 2048, %s479, %s467, 64, 64, 4
        $region68: #{tpu_custom_call.1} parent=63 // pred_fallthru
          _
      $region64: #{tpu_custom_call.1} parent=5 // pred_fallthru
        _
      %p485 = scmp.le.s32.totalorder 1, %s29
      %p486 = scmp.lt.s32.totalorder %s29, 3
      %p487 = pnand %p485, %p486
      %p488 = pneg %p487
      // Predicated region
      $region69: #{tpu_custom_call.1} parent=5 // pred_check
        _
      $region70: #{tpu_custom_call.1} parent=5 // pred_check_branch
        %490 = sbr.rel (%p487) target = $region72
      $region71: #{tpu_custom_call.1} parent=5 // pred_region
        %s491 = ssub.s32 %s29, 1
        %s492 = sand.u32 %s42, 1
        %s493 = scalar_lea.sflag [#allocation3], %s492
        %s494 = sand.u32 %s42, 1
        %s495 = smul.addr %s494, 128
        %s496 = scalar_lea.vmem [#allocation2], %s495
        // Predicated region
        $region73: #{tpu_custom_call.1} parent=71 // pred_check
          %p497 = pneg %p55
        $region74: #{tpu_custom_call.1} parent=71 // pred_check_branch
          %499 = sbr.rel (%p497) target = $region76
        $region75: #{tpu_custom_call.1} parent=71 // pred_region
          %501 = dma.done %s493, 2048
        $region76: #{tpu_custom_call.1} parent=71 // pred_fallthru
          _
        // Predicated region
        $region77: #{tpu_custom_call.1} parent=71 // pred_check
          %p502 = pneg %p76
        $region78: #{tpu_custom_call.1} parent=71 // pred_check_branch
          %504 = sbr.rel (%p502) target = $region80
        $region79: #{tpu_custom_call.1} parent=71 // pred_region
          %506 = dma.done [#allocation6], 1024
        $region80: #{tpu_custom_call.1} parent=71 // pred_fallthru
          _
        // Predicated region
        $region81: #{tpu_custom_call.1} parent=71 // pred_check
          %p507 = pneg %p97
        $region82: #{tpu_custom_call.1} parent=71 // pred_check_branch
          %509 = sbr.rel (%p507) target = $region84
        $region83: #{tpu_custom_call.1} parent=71 // pred_region
          %511 = dma.done [#allocation6], 16
        $region84: #{tpu_custom_call.1} parent=71 // pred_fallthru
          _
        // Predicated region
        $region85: #{tpu_custom_call.1} parent=71 // pred_check
          %p512 = pneg %p118
        $region86: #{tpu_custom_call.1} parent=71 // pred_check_branch
          %514 = sbr.rel (%p512) target = $region88
        $region87: #{tpu_custom_call.1} parent=71 // pred_region
          %516 = dma.done [#allocation9], 2048
        $region88: #{tpu_custom_call.1} parent=71 // pred_fallthru
          _
        // Predicated region
        $region89: #{tpu_custom_call.1} parent=71 // pred_check
          %p517 = pneg %p160
        $region90: #{tpu_custom_call.1} parent=71 // pred_check_branch
          %519 = sbr.rel (%p517) target = $region92
        $region91: #{tpu_custom_call.1} parent=71 // pred_region
          %521 = dma.done [#allocation9], 4096
        $region92: #{tpu_custom_call.1} parent=71 // pred_fallthru
          _
        // Predicated region
        $region93: #{tpu_custom_call.1} parent=71 // pred_check
          %p522 = pneg %p202
        $region94: #{tpu_custom_call.1} parent=71 // pred_check_branch
          %524 = sbr.rel (%p522) target = $region96
        $region95: #{tpu_custom_call.1} parent=71 // pred_region
          %526 = dma.done [#allocation12], 2048
        $region96: #{tpu_custom_call.1} parent=71 // pred_fallthru
          _
        // Predicated region
        $region97: #{tpu_custom_call.1} parent=71 // pred_check
          %p527 = pneg %p244
        $region98: #{tpu_custom_call.1} parent=71 // pred_check_branch
          %529 = sbr.rel (%p527) target = $region100
        $region99: #{tpu_custom_call.1} parent=71 // pred_region
          %531 = dma.done [#allocation12], 1024
        $region100: #{tpu_custom_call.1} parent=71 // pred_fallthru
          _
        // Predicated region
        $region101: #{tpu_custom_call.1} parent=71 // pred_check
          %p532 = pneg %p286
        $region102: #{tpu_custom_call.1} parent=71 // pred_check_branch
          %534 = sbr.rel (%p532) target = $region104
        $region103: #{tpu_custom_call.1} parent=71 // pred_region
          %536 = dma.done [#allocation15], 1024
        $region104: #{tpu_custom_call.1} parent=71 // pred_fallthru
          _
        %s537 = sand.u32 %s42, 1
        %s538 = scalar_lea.sflag [#allocation3], %s537
        %s539 = sand.u32 %s42, 1
        %s540 = smul.addr %s539, 128
        %s541 = scalar_lea.vmem [#allocation2], %s540
        %p542 = pneg %p55
        %p543 = pneg %p52
        %p544 = pneg %p76
        %p545 = pneg %p73
        %p546 = pneg %p97
        %p547 = pneg %p94
        %p548 = pneg %p118
        %p549 = pneg %p115
        %p550 = pneg %p139
        %p551 = pneg %p136
        %p552 = pneg %p160
        %p553 = pneg %p157
        %p554 = pneg %p181
        %p555 = pneg %p178
        %p556 = pneg %p202
        %p557 = pneg %p199
        %p558 = pneg %p223
        %p559 = pneg %p220
        %p560 = pneg %p244
        %p561 = pneg %p241
        %p562 = pneg %p265
        %p563 = pneg %p262
        %p564 = pneg %p286
        %p565 = pneg %p283
        %p566 = pneg %p307
        %p567 = pneg %p304
        %p568 = pneg %p333
        %p569 = pneg %p330
        %s570 = sand.u32 %s320, 1
        %s571 = scalar_lea.sflag [#allocation4], %s570
        %s572 = sand.u32 %s320, 1
        %s573 = smul.addr %s572, 256
        %s574 = scalar_lea.vmem [#allocation16], %s573
        %s575 = smul.u32 32, %s34
        %s576 = smul.u32 32, %s34
        %v577 = vld [vmem:[%s496] sm:$0xf]
        %v578 = vld [vmem:[%s496 + $0x4] sm:$0xf]
        %v579 = vld [vmem:[%s496 + $0x8] sm:$0xf]
        %v580 = vld [vmem:[%s496 + $0xc] sm:$0xf]
        %v581 = vld [vmem:[%s496 + $0x10] sm:$0xf]
        %v582 = vld [vmem:[%s496 + $0x14] sm:$0xf]
        %v583 = vld [vmem:[%s496 + $0x18] sm:$0xf]
        %v584 = vld [vmem:[%s496 + $0x1c] sm:$0xf]
        %v585 = vld [vmem:[%s496 + $0x20] sm:$0xf]
        %v586 = vld [vmem:[%s496 + $0x24] sm:$0xf]
        %v587 = vld [vmem:[%s496 + $0x28] sm:$0xf]
        %v588 = vld [vmem:[%s496 + $0x2c] sm:$0xf]
        %v589 = vld [vmem:[%s496 + $0x30] sm:$0xf]
        %v590 = vld [vmem:[%s496 + $0x34] sm:$0xf]
        %v591 = vld [vmem:[%s496 + $0x38] sm:$0xf]
        %v592 = vld [vmem:[%s496 + $0x3c] sm:$0xf]
        %v593 = vld [vmem:[%s496 + $0x40] sm:$0xf]
        %v594 = vld [vmem:[%s496 + $0x44] sm:$0xf]
        %v595 = vld [vmem:[%s496 + $0x48] sm:$0xf]
        %v596 = vld [vmem:[%s496 + $0x4c] sm:$0xf]
        %v597 = vld [vmem:[%s496 + $0x50] sm:$0xf]
        %v598 = vld [vmem:[%s496 + $0x54] sm:$0xf]
        %v599 = vld [vmem:[%s496 + $0x58] sm:$0xf]
        %v600 = vld [vmem:[%s496 + $0x5c] sm:$0xf]
        %v601 = vld [vmem:[%s496 + $0x60] sm:$0xf]
        %v602 = vld [vmem:[%s496 + $0x64] sm:$0xf]
        %v603 = vld [vmem:[%s496 + $0x68] sm:$0xf]
        %v604 = vld [vmem:[%s496 + $0x6c] sm:$0xf]
        %v605 = vld [vmem:[%s496 + $0x70] sm:$0xf]
        %v606 = vld [vmem:[%s496 + $0x74] sm:$0xf]
        %v607 = vld [vmem:[%s496 + $0x78] sm:$0xf]
        %v608 = vld [vmem:[%s496 + $0x7c] sm:$0xf]
        %v609 = vld [vmem:[#allocation5] sm:$0xf]
        %v610 = vld [vmem:[#allocation5 + $0x4] sm:$0xf]
        %v611 = vld [vmem:[#allocation5 + $0x8] sm:$0xf]
        %v612 = vld [vmem:[#allocation5 + $0xc] sm:$0xf]
        %v613 = vld [vmem:[#allocation5 + $0x10] sm:$0xf]
        %v614 = vld [vmem:[#allocation5 + $0x14] sm:$0xf]
        %v615 = vld [vmem:[#allocation5 + $0x18] sm:$0xf]
        %v616 = vld [vmem:[#allocation5 + $0x1c] sm:$0xf]
        %v617 = vld [vmem:[#allocation5 + $0x20] sm:$0xf]
        %v618 = vld [vmem:[#allocation5 + $0x24] sm:$0xf]
        %v619 = vld [vmem:[#allocation5 + $0x28] sm:$0xf]
        %v620 = vld [vmem:[#allocation5 + $0x2c] sm:$0xf]
        %v621 = vld [vmem:[#allocation5 + $0x30] sm:$0xf]
        %v622 = vld [vmem:[#allocation5 + $0x34] sm:$0xf]
        %v623 = vld [vmem:[#allocation5 + $0x38] sm:$0xf]
        %v624 = vld [vmem:[#allocation5 + $0x3c] sm:$0xf]
        %v625 = vld [vmem:[#allocation7] sm:$0x1]
        %v627 = vperm.slane %v625, 0
        %v661 = vunpack.c.l.b16 %v577
        %v662 = vunpack.c.l.b16 %v578
        %v663 = vunpack.c.l.b16 %v579
        %v664 = vunpack.c.l.b16 %v580
        %v665 = vunpack.c.l.b16 %v581
        %v666 = vunpack.c.l.b16 %v582
        %v667 = vunpack.c.l.b16 %v583
        %v668 = vunpack.c.l.b16 %v584
        %v669 = vunpack.c.l.b16 %v585
        %v670 = vunpack.c.l.b16 %v586
        %v671 = vunpack.c.l.b16 %v587
        %v672 = vunpack.c.l.b16 %v588
        %v673 = vunpack.c.l.b16 %v589
        %v674 = vunpack.c.l.b16 %v590
        %v675 = vunpack.c.l.b16 %v591
        %v676 = vunpack.c.l.b16 %v592
        %v677 = vunpack.c.l.b16 %v593
        %v678 = vunpack.c.l.b16 %v594
        %v679 = vunpack.c.l.b16 %v595
        %v680 = vunpack.c.l.b16 %v596
        %v681 = vunpack.c.l.b16 %v597
        %v682 = vunpack.c.l.b16 %v598
        %v683 = vunpack.c.l.b16 %v599
        %v684 = vunpack.c.l.b16 %v600
        %v685 = vunpack.c.l.b16 %v601
        %v686 = vunpack.c.l.b16 %v602
        %v687 = vunpack.c.l.b16 %v603
        %v688 = vunpack.c.l.b16 %v604
        %v689 = vunpack.c.l.b16 %v605
        %v690 = vunpack.c.l.b16 %v606
        %v691 = vunpack.c.l.b16 %v607
        %v692 = vunpack.c.l.b16 %v608
        %v693 = vpack.c.b16 %v662, %v661
        %v694 = vpack.c.b16 %v664, %v663
        %v695 = vpack.c.b16 %v666, %v665
        %v696 = vpack.c.b16 %v668, %v667
        %v697 = vpack.c.b16 %v670, %v669
        %v698 = vpack.c.b16 %v672, %v671
        %v699 = vpack.c.b16 %v674, %v673
        %v700 = vpack.c.b16 %v676, %v675
        %v701 = vpack.c.b16 %v678, %v677
        %v702 = vpack.c.b16 %v680, %v679
        %v703 = vpack.c.b16 %v682, %v681
        %v704 = vpack.c.b16 %v684, %v683
        %v705 = vpack.c.b16 %v686, %v685
        %v706 = vpack.c.b16 %v688, %v687
        %v707 = vpack.c.b16 %v690, %v689
        %v708 = vpack.c.b16 %v692, %v691
        %v741 = vunpack.c.l.b16 %v609
        %v742 = vunpack.c.l.b16 %v610
        %v743 = vunpack.c.l.b16 %v611
        %v744 = vunpack.c.l.b16 %v612
        %v745 = vunpack.c.l.b16 %v613
        %v746 = vunpack.c.l.b16 %v614
        %v747 = vunpack.c.l.b16 %v615
        %v748 = vunpack.c.l.b16 %v616
        %v749 = vunpack.c.l.b16 %v617
        %v750 = vunpack.c.l.b16 %v618
        %v751 = vunpack.c.l.b16 %v619
        %v752 = vunpack.c.l.b16 %v620
        %v753 = vunpack.c.l.b16 %v621
        %v754 = vunpack.c.l.b16 %v622
        %v755 = vunpack.c.l.b16 %v623
        %v756 = vunpack.c.l.b16 %v624
        %v757 = vpack.c.b16 %v742, %v741
        %v758 = vpack.c.b16 %v744, %v743
        %v759 = vpack.c.b16 %v746, %v745
        %v760 = vpack.c.b16 %v748, %v747
        %v761 = vpack.c.b16 %v750, %v749
        %v762 = vpack.c.b16 %v752, %v751
        %v763 = vpack.c.b16 %v754, %v753
        %v764 = vpack.c.b16 %v756, %v755
        %773 = vmatpush.bf16.msra.mxu0 %v764
        %774 = vmatpush.bf16.msra.mxu0 %v763
        %775 = vmatpush.bf16.msra.mxu0 %v762
        %776 = vmatpush.bf16.msra.mxu0 %v761
        %777 = vmatpush.bf16.msra.mxu0 %v760
        %778 = vmatpush.bf16.msra.mxu0 %v759
        %779 = vmatpush.bf16.msra.mxu0 %v758
        %780 = vmatpush.bf16.msra.mxu0 %v757
        %781 = vmatmul.bf16.gmra.mxu0 %v693
        %v782 = vpop.f32.mrf.mxu0
        %v783 = vadd.f32 %v627, %v782
        %v784 = vpop.f32.mrf.mxu0
        %v785 = vadd.f32 %v627, %v784
        %786 = vmatmul.bf16.gmra.mxu0 %v694
        %v787 = vpop.f32.mrf.mxu0
        %v788 = vadd.f32 %v627, %v787
        %v789 = vpop.f32.mrf.mxu0
        %v790 = vadd.f32 %v627, %v789
        %791 = vmatmul.bf16.gmra.mxu0 %v695
        %v792 = vpop.f32.mrf.mxu0
        %v793 = vadd.f32 %v627, %v792
        %v794 = vpop.f32.mrf.mxu0
        %v795 = vadd.f32 %v627, %v794
        %796 = vmatmul.bf16.gmra.mxu0 %v696
        %v797 = vpop.f32.mrf.mxu0
        %v798 = vadd.f32 %v627, %v797
        %v799 = vpop.f32.mrf.mxu0
        %v800 = vadd.f32 %v627, %v799
        %801 = vmatmul.bf16.gmra.mxu0 %v697
        %v802 = vpop.f32.mrf.mxu0
        %v803 = vadd.f32 %v627, %v802
        %v804 = vpop.f32.mrf.mxu0
        %v805 = vadd.f32 %v627, %v804
        %806 = vmatmul.bf16.gmra.mxu0 %v698
        %v807 = vpop.f32.mrf.mxu0
        %v808 = vadd.f32 %v627, %v807
        %v809 = vpop.f32.mrf.mxu0
        %v810 = vadd.f32 %v627, %v809
        %811 = vmatmul.bf16.gmra.mxu0 %v699
        %v812 = vpop.f32.mrf.mxu0
        %v813 = vadd.f32 %v627, %v812
        %v814 = vpop.f32.mrf.mxu0
        %v815 = vadd.f32 %v627, %v814
        %816 = vmatmul.bf16.gmra.mxu0 %v700
        %v817 = vpop.f32.mrf.mxu0
        %v818 = vadd.f32 %v627, %v817
        %v819 = vpop.f32.mrf.mxu0
        %v820 = vadd.f32 %v627, %v819
        %821 = vmatmul.bf16.gmra.mxu0 %v701
        %v822 = vpop.f32.mrf.mxu0
        %v823 = vadd.f32 %v627, %v822
        %v824 = vpop.f32.mrf.mxu0
        %v825 = vadd.f32 %v627, %v824
        %826 = vmatmul.bf16.gmra.mxu0 %v702
        %v827 = vpop.f32.mrf.mxu0
        %v828 = vadd.f32 %v627, %v827
        %v829 = vpop.f32.mrf.mxu0
        %v830 = vadd.f32 %v627, %v829
        %831 = vmatmul.bf16.gmra.mxu0 %v703
        %v832 = vpop.f32.mrf.mxu0
        %v833 = vadd.f32 %v627, %v832
        %v834 = vpop.f32.mrf.mxu0
        %v835 = vadd.f32 %v627, %v834
        %836 = vmatmul.bf16.gmra.mxu0 %v704
        %v837 = vpop.f32.mrf.mxu0
        %v838 = vadd.f32 %v627, %v837
        %v839 = vpop.f32.mrf.mxu0
        %v840 = vadd.f32 %v627, %v839
        %841 = vmatmul.bf16.gmra.mxu0 %v705
        %v842 = vpop.f32.mrf.mxu0
        %v843 = vadd.f32 %v627, %v842
        %v844 = vpop.f32.mrf.mxu0
        %v845 = vadd.f32 %v627, %v844
        %846 = vmatmul.bf16.gmra.mxu0 %v706
        %v847 = vpop.f32.mrf.mxu0
        %v848 = vadd.f32 %v627, %v847
        %v849 = vpop.f32.mrf.mxu0
        %v850 = vadd.f32 %v627, %v849
        %851 = vmatmul.bf16.gmra.mxu0 %v707
        %v852 = vpop.f32.mrf.mxu0
        %v853 = vadd.f32 %v627, %v852
        %v854 = vpop.f32.mrf.mxu0
        %v855 = vadd.f32 %v627, %v854
        %856 = vmatmul.bf16.gmra.mxu0 %v708
        %v857 = vpop.f32.mrf.mxu0
        %v858 = vadd.f32 %v627, %v857
        %v859 = vpop.f32.mrf.mxu0
        %v860 = vadd.f32 %v627, %v859
        %861 = vdwg.mxu0
        %v862 = vmax.f32 %v783, 0.0
        %v863 = vmax.f32 %v785, 0.0
        %v864 = vmax.f32 %v788, 0.0
        %v865 = vmax.f32 %v790, 0.0
        %v866 = vmax.f32 %v793, 0.0
        %v867 = vmax.f32 %v795, 0.0
        %v868 = vmax.f32 %v798, 0.0
        %v869 = vmax.f32 %v800, 0.0
        %v870 = vmax.f32 %v803, 0.0
        %v871 = vmax.f32 %v805, 0.0
        %v872 = vmax.f32 %v808, 0.0
        %v873 = vmax.f32 %v810, 0.0
        %v874 = vmax.f32 %v813, 0.0
        %v875 = vmax.f32 %v815, 0.0
        %v876 = vmax.f32 %v818, 0.0
        %v877 = vmax.f32 %v820, 0.0
        %v878 = vmax.f32 %v823, 0.0
        %v879 = vmax.f32 %v825, 0.0
        %v880 = vmax.f32 %v828, 0.0
        %v881 = vmax.f32 %v830, 0.0
        %v882 = vmax.f32 %v833, 0.0
        %v883 = vmax.f32 %v835, 0.0
        %v884 = vmax.f32 %v838, 0.0
        %v885 = vmax.f32 %v840, 0.0
        %v886 = vmax.f32 %v843, 0.0
        %v887 = vmax.f32 %v845, 0.0
        %v888 = vmax.f32 %v848, 0.0
        %v889 = vmax.f32 %v850, 0.0
        %v890 = vmax.f32 %v853, 0.0
        %v891 = vmax.f32 %v855, 0.0
        %v892 = vmax.f32 %v858, 0.0
        %v893 = vmax.f32 %v860, 0.0
        %v894 = vpack.c.bf16 %v863, %v862
        %v895 = vpack.c.bf16 %v865, %v864
        %v896 = vpack.c.bf16 %v867, %v866
        %v897 = vpack.c.bf16 %v869, %v868
        %v898 = vpack.c.bf16 %v871, %v870
        %v899 = vpack.c.bf16 %v873, %v872
        %v900 = vpack.c.bf16 %v875, %v874
        %v901 = vpack.c.bf16 %v877, %v876
        %v902 = vpack.c.bf16 %v879, %v878
        %v903 = vpack.c.bf16 %v881, %v880
        %v904 = vpack.c.bf16 %v883, %v882
        %v905 = vpack.c.bf16 %v885, %v884
        %v906 = vpack.c.bf16 %v887, %v886
        %v907 = vpack.c.bf16 %v889, %v888
        %v908 = vpack.c.bf16 %v891, %v890
        %v909 = vpack.c.bf16 %v893, %v892
        %v910 = vld [vmem:[#allocation8] sm:$0xff]
        %v911 = vld [vmem:[#allocation8 + $0x8] sm:$0xff]
        %v912 = vld [vmem:[#allocation8 + $0x10] sm:$0xff]
        %v913 = vld [vmem:[#allocation8 + $0x18] sm:$0xff]
        %v914 = vld [vmem:[#allocation8 + $0x20] sm:$0xff]
        %v915 = vld [vmem:[#allocation8 + $0x28] sm:$0xff]
        %v916 = vld [vmem:[#allocation8 + $0x30] sm:$0xff]
        %v917 = vld [vmem:[#allocation8 + $0x38] sm:$0xff]
        %v918 = vld [vmem:[#allocation8 + $0x40] sm:$0xff]
        %v919 = vld [vmem:[#allocation8 + $0x48] sm:$0xff]
        %v920 = vld [vmem:[#allocation8 + $0x50] sm:$0xff]
        %v921 = vld [vmem:[#allocation8 + $0x58] sm:$0xff]
        %v922 = vld [vmem:[#allocation8 + $0x60] sm:$0xff]
        %v923 = vld [vmem:[#allocation8 + $0x68] sm:$0xff]
        %v924 = vld [vmem:[#allocation8 + $0x70] sm:$0xff]
        %v925 = vld [vmem:[#allocation8 + $0x78] sm:$0xff]
        %v926 = vld [vmem:[%s4] sm:$0x3]
        %v928 = vperm.slane %v926, 0
        %v929 = vperm.slane %v926, 1
        %v948 = vunpack.c.l.b16 %v910
        %v949 = vunpack.c.h.b16 %v910
        %v950 = vunpack.c.l.b16 %v911
        %v951 = vunpack.c.h.b16 %v911
        %v952 = vunpack.c.l.b16 %v912
        %v953 = vunpack.c.h.b16 %v912
        %v954 = vunpack.c.l.b16 %v913
        %v955 = vunpack.c.h.b16 %v913
        %v956 = vunpack.c.l.b16 %v914
        %v957 = vunpack.c.h.b16 %v914
        %v958 = vunpack.c.l.b16 %v915
        %v959 = vunpack.c.h.b16 %v915
        %v960 = vunpack.c.l.b16 %v916
        %v961 = vunpack.c.h.b16 %v916
        %v962 = vunpack.c.l.b16 %v917
        %v963 = vunpack.c.h.b16 %v917
        %v964 = vunpack.c.l.b16 %v918
        %v965 = vunpack.c.h.b16 %v918
        %v966 = vunpack.c.l.b16 %v919
        %v967 = vunpack.c.h.b16 %v919
        %v968 = vunpack.c.l.b16 %v920
        %v969 = vunpack.c.h.b16 %v920
        %v970 = vunpack.c.l.b16 %v921
        %v971 = vunpack.c.h.b16 %v921
        %v972 = vunpack.c.l.b16 %v922
        %v973 = vunpack.c.h.b16 %v922
        %v974 = vunpack.c.l.b16 %v923
        %v975 = vunpack.c.h.b16 %v923
        %v976 = vunpack.c.l.b16 %v924
        %v977 = vunpack.c.h.b16 %v924
        %v978 = vunpack.c.l.b16 %v925
        %v979 = vunpack.c.h.b16 %v925
        %v980 = vpack.c.b16 %v950, %v948
        %v981 = vpack.c.b16 %v951, %v949
        %v982 = vpack.c.b16 %v954, %v952
        %v983 = vpack.c.b16 %v955, %v953
        %v984 = vpack.c.b16 %v958, %v956
        %v985 = vpack.c.b16 %v959, %v957
        %v986 = vpack.c.b16 %v962, %v960
        %v987 = vpack.c.b16 %v963, %v961
        %v988 = vpack.c.b16 %v966, %v964
        %v989 = vpack.c.b16 %v967, %v965
        %v990 = vpack.c.b16 %v970, %v968
        %v991 = vpack.c.b16 %v971, %v969
        %v992 = vpack.c.b16 %v974, %v972
        %v993 = vpack.c.b16 %v975, %v973
        %v994 = vpack.c.b16 %v978, %v976
        %v995 = vpack.c.b16 %v979, %v977
        %1012 = vmatpush.bf16.msra.mxu0 %v994
        %1013 = vmatpush.bf16.msra.mxu0 %v992
        %1014 = vmatpush.bf16.msra.mxu0 %v990
        %1015 = vmatpush.bf16.msra.mxu0 %v988
        %1016 = vmatpush.bf16.msra.mxu0 %v986
        %1017 = vmatpush.bf16.msra.mxu0 %v984
        %1018 = vmatpush.bf16.msra.mxu0 %v982
        %1019 = vmatpush.bf16.msra.mxu0 %v980
        %1020 = vmatmul.bf16.gmra.mxu0 %v894
        %v1021 = vpop.f32.mrf.mxu0
        %v1022 = vadd.f32 %v928, %v1021
        %v1023 = vpop.f32.mrf.mxu0
        %v1024 = vadd.f32 %v928, %v1023
        %1025 = vmatmul.bf16.gmra.mxu0 %v895
        %v1026 = vpop.f32.mrf.mxu0
        %v1027 = vadd.f32 %v928, %v1026
        %v1028 = vpop.f32.mrf.mxu0
        %v1029 = vadd.f32 %v928, %v1028
        %1030 = vmatmul.bf16.gmra.mxu0 %v896
        %v1031 = vpop.f32.mrf.mxu0
        %v1032 = vadd.f32 %v928, %v1031
        %v1033 = vpop.f32.mrf.mxu0
        %v1034 = vadd.f32 %v928, %v1033
        %1035 = vmatmul.bf16.gmra.mxu0 %v897
        %v1036 = vpop.f32.mrf.mxu0
        %v1037 = vadd.f32 %v928, %v1036
        %v1038 = vpop.f32.mrf.mxu0
        %v1039 = vadd.f32 %v928, %v1038
        %1040 = vmatmul.bf16.gmra.mxu0 %v898
        %v1041 = vpop.f32.mrf.mxu0
        %v1042 = vadd.f32 %v928, %v1041
        %v1043 = vpop.f32.mrf.mxu0
        %v1044 = vadd.f32 %v928, %v1043
        %1045 = vmatmul.bf16.gmra.mxu0 %v899
        %v1046 = vpop.f32.mrf.mxu0
        %v1047 = vadd.f32 %v928, %v1046
        %v1048 = vpop.f32.mrf.mxu0
        %v1049 = vadd.f32 %v928, %v1048
        %1050 = vmatmul.bf16.gmra.mxu0 %v900
        %v1051 = vpop.f32.mrf.mxu0
        %v1052 = vadd.f32 %v928, %v1051
        %v1053 = vpop.f32.mrf.mxu0
        %v1054 = vadd.f32 %v928, %v1053
        %1055 = vmatmul.bf16.gmra.mxu0 %v901
        %v1056 = vpop.f32.mrf.mxu0
        %v1057 = vadd.f32 %v928, %v1056
        %v1058 = vpop.f32.mrf.mxu0
        %v1059 = vadd.f32 %v928, %v1058
        %1060 = vmatmul.bf16.gmra.mxu0 %v902
        %v1061 = vpop.f32.mrf.mxu0
        %v1062 = vadd.f32 %v928, %v1061
        %v1063 = vpop.f32.mrf.mxu0
        %v1064 = vadd.f32 %v928, %v1063
        %1065 = vmatmul.bf16.gmra.mxu0 %v903
        %v1066 = vpop.f32.mrf.mxu0
        %v1067 = vadd.f32 %v928, %v1066
        %v1068 = vpop.f32.mrf.mxu0
        %v1069 = vadd.f32 %v928, %v1068
        %1070 = vmatmul.bf16.gmra.mxu0 %v904
        %v1071 = vpop.f32.mrf.mxu0
        %v1072 = vadd.f32 %v928, %v1071
        %v1073 = vpop.f32.mrf.mxu0
        %v1074 = vadd.f32 %v928, %v1073
        %1075 = vmatmul.bf16.gmra.mxu0 %v905
        %v1076 = vpop.f32.mrf.mxu0
        %v1077 = vadd.f32 %v928, %v1076
        %v1078 = vpop.f32.mrf.mxu0
        %v1079 = vadd.f32 %v928, %v1078
        %1080 = vmatmul.bf16.gmra.mxu0 %v906
        %v1081 = vpop.f32.mrf.mxu0
        %v1082 = vadd.f32 %v928, %v1081
        %v1083 = vpop.f32.mrf.mxu0
        %v1084 = vadd.f32 %v928, %v1083
        %1085 = vmatmul.bf16.gmra.mxu0 %v907
        %v1086 = vpop.f32.mrf.mxu0
        %v1087 = vadd.f32 %v928, %v1086
        %v1088 = vpop.f32.mrf.mxu0
        %v1089 = vadd.f32 %v928, %v1088
        %1090 = vmatmul.bf16.gmra.mxu0 %v908
        %v1091 = vpop.f32.mrf.mxu0
        %v1092 = vadd.f32 %v928, %v1091
        %v1093 = vpop.f32.mrf.mxu0
        %v1094 = vadd.f32 %v928, %v1093
        %1095 = vmatmul.bf16.gmra.mxu0 %v909
        %v1096 = vpop.f32.mrf.mxu0
        %v1097 = vadd.f32 %v928, %v1096
        %v1098 = vpop.f32.mrf.mxu0
        %v1099 = vadd.f32 %v928, %v1098
        %1100 = vdwg.mxu0
        %1101 = vmatpush.bf16.msra.mxu0 %v995
        %1102 = vmatpush.bf16.msra.mxu0 %v993
        %1103 = vmatpush.bf16.msra.mxu0 %v991
        %1104 = vmatpush.bf16.msra.mxu0 %v989
        %1105 = vmatpush.bf16.msra.mxu0 %v987
        %1106 = vmatpush.bf16.msra.mxu0 %v985
        %1107 = vmatpush.bf16.msra.mxu0 %v983
        %1108 = vmatpush.bf16.msra.mxu0 %v981
        %1109 = vmatmul.bf16.gmra.mxu0 %v894
        %v1110 = vpop.f32.mrf.mxu0
        %v1111 = vadd.f32 %v929, %v1110
        %v1112 = vpop.f32.mrf.mxu0
        %v1113 = vadd.f32 %v929, %v1112
        %1114 = vmatmul.bf16.gmra.mxu0 %v895
        %v1115 = vpop.f32.mrf.mxu0
        %v1116 = vadd.f32 %v929, %v1115
        %v1117 = vpop.f32.mrf.mxu0
        %v1118 = vadd.f32 %v929, %v1117
        %1119 = vmatmul.bf16.gmra.mxu0 %v896
        %v1120 = vpop.f32.mrf.mxu0
        %v1121 = vadd.f32 %v929, %v1120
        %v1122 = vpop.f32.mrf.mxu0
        %v1123 = vadd.f32 %v929, %v1122
        %1124 = vmatmul.bf16.gmra.mxu0 %v897
        %v1125 = vpop.f32.mrf.mxu0
        %v1126 = vadd.f32 %v929, %v1125
        %v1127 = vpop.f32.mrf.mxu0
        %v1128 = vadd.f32 %v929, %v1127
        %1129 = vmatmul.bf16.gmra.mxu0 %v898
        %v1130 = vpop.f32.mrf.mxu0
        %v1131 = vadd.f32 %v929, %v1130
        %v1132 = vpop.f32.mrf.mxu0
        %v1133 = vadd.f32 %v929, %v1132
        %1134 = vmatmul.bf16.gmra.mxu0 %v899
        %v1135 = vpop.f32.mrf.mxu0
        %v1136 = vadd.f32 %v929, %v1135
        %v1137 = vpop.f32.mrf.mxu0
        %v1138 = vadd.f32 %v929, %v1137
        %1139 = vmatmul.bf16.gmra.mxu0 %v900
        %v1140 = vpop.f32.mrf.mxu0
        %v1141 = vadd.f32 %v929, %v1140
        %v1142 = vpop.f32.mrf.mxu0
        %v1143 = vadd.f32 %v929, %v1142
        %1144 = vmatmul.bf16.gmra.mxu0 %v901
        %v1145 = vpop.f32.mrf.mxu0
        %v1146 = vadd.f32 %v929, %v1145
        %v1147 = vpop.f32.mrf.mxu0
        %v1148 = vadd.f32 %v929, %v1147
        %1149 = vmatmul.bf16.gmra.mxu0 %v902
        %v1150 = vpop.f32.mrf.mxu0
        %v1151 = vadd.f32 %v929, %v1150
        %v1152 = vpop.f32.mrf.mxu0
        %v1153 = vadd.f32 %v929, %v1152
        %1154 = vmatmul.bf16.gmra.mxu0 %v903
        %v1155 = vpop.f32.mrf.mxu0
        %v1156 = vadd.f32 %v929, %v1155
        %v1157 = vpop.f32.mrf.mxu0
        %v1158 = vadd.f32 %v929, %v1157
        %1159 = vmatmul.bf16.gmra.mxu0 %v904
        %v1160 = vpop.f32.mrf.mxu0
        %v1161 = vadd.f32 %v929, %v1160
        %v1162 = vpop.f32.mrf.mxu0
        %v1163 = vadd.f32 %v929, %v1162
        %1164 = vmatmul.bf16.gmra.mxu0 %v905
        %v1165 = vpop.f32.mrf.mxu0
        %v1166 = vadd.f32 %v929, %v1165
        %v1167 = vpop.f32.mrf.mxu0
        %v1168 = vadd.f32 %v929, %v1167
        %1169 = vmatmul.bf16.gmra.mxu0 %v906
        %v1170 = vpop.f32.mrf.mxu0
        %v1171 = vadd.f32 %v929, %v1170
        %v1172 = vpop.f32.mrf.mxu0
        %v1173 = vadd.f32 %v929, %v1172
        %1174 = vmatmul.bf16.gmra.mxu0 %v907
        %v1175 = vpop.f32.mrf.mxu0
        %v1176 = vadd.f32 %v929, %v1175
        %v1177 = vpop.f32.mrf.mxu0
        %v1178 = vadd.f32 %v929, %v1177
        %1179 = vmatmul.bf16.gmra.mxu0 %v908
        %v1180 = vpop.f32.mrf.mxu0
        %v1181 = vadd.f32 %v929, %v1180
        %v1182 = vpop.f32.mrf.mxu0
        %v1183 = vadd.f32 %v929, %v1182
        %1184 = vmatmul.bf16.gmra.mxu0 %v909
        %v1185 = vpop.f32.mrf.mxu0
        %v1186 = vadd.f32 %v929, %v1185
        %v1187 = vpop.f32.mrf.mxu0
        %v1188 = vadd.f32 %v929, %v1187
        %1189 = vdwg.mxu0
        %v1190 = vmax.f32 %v1022, 0.0
        %v1191 = vmax.f32 %v1111, 0.0
        %v1192 = vmax.f32 %v1024, 0.0
        %v1193 = vmax.f32 %v1113, 0.0
        %v1194 = vmax.f32 %v1027, 0.0
        %v1195 = vmax.f32 %v1116, 0.0
        %v1196 = vmax.f32 %v1029, 0.0
        %v1197 = vmax.f32 %v1118, 0.0
        %v1198 = vmax.f32 %v1032, 0.0
        %v1199 = vmax.f32 %v1121, 0.0
        %v1200 = vmax.f32 %v1034, 0.0
        %v1201 = vmax.f32 %v1123, 0.0
        %v1202 = vmax.f32 %v1037, 0.0
        %v1203 = vmax.f32 %v1126, 0.0
        %v1204 = vmax.f32 %v1039, 0.0
        %v1205 = vmax.f32 %v1128, 0.0
        %v1206 = vmax.f32 %v1042, 0.0
        %v1207 = vmax.f32 %v1131, 0.0
        %v1208 = vmax.f32 %v1044, 0.0
        %v1209 = vmax.f32 %v1133, 0.0
        %v1210 = vmax.f32 %v1047, 0.0
        %v1211 = vmax.f32 %v1136, 0.0
        %v1212 = vmax.f32 %v1049, 0.0
        %v1213 = vmax.f32 %v1138, 0.0
        %v1214 = vmax.f32 %v1052, 0.0
        %v1215 = vmax.f32 %v1141, 0.0
        %v1216 = vmax.f32 %v1054, 0.0
        %v1217 = vmax.f32 %v1143, 0.0
        %v1218 = vmax.f32 %v1057, 0.0
        %v1219 = vmax.f32 %v1146, 0.0
        %v1220 = vmax.f32 %v1059, 0.0
        %v1221 = vmax.f32 %v1148, 0.0
        %v1222 = vmax.f32 %v1062, 0.0
        %v1223 = vmax.f32 %v1151, 0.0
        %v1224 = vmax.f32 %v1064, 0.0
        %v1225 = vmax.f32 %v1153, 0.0
        %v1226 = vmax.f32 %v1067, 0.0
        %v1227 = vmax.f32 %v1156, 0.0
        %v1228 = vmax.f32 %v1069, 0.0
        %v1229 = vmax.f32 %v1158, 0.0
        %v1230 = vmax.f32 %v1072, 0.0
        %v1231 = vmax.f32 %v1161, 0.0
        %v1232 = vmax.f32 %v1074, 0.0
        %v1233 = vmax.f32 %v1163, 0.0
        %v1234 = vmax.f32 %v1077, 0.0
        %v1235 = vmax.f32 %v1166, 0.0
        %v1236 = vmax.f32 %v1079, 0.0
        %v1237 = vmax.f32 %v1168, 0.0
        %v1238 = vmax.f32 %v1082, 0.0
        %v1239 = vmax.f32 %v1171, 0.0
        %v1240 = vmax.f32 %v1084, 0.0
        %v1241 = vmax.f32 %v1173, 0.0
        %v1242 = vmax.f32 %v1087, 0.0
        %v1243 = vmax.f32 %v1176, 0.0
        %v1244 = vmax.f32 %v1089, 0.0
        %v1245 = vmax.f32 %v1178, 0.0
        %v1246 = vmax.f32 %v1092, 0.0
        %v1247 = vmax.f32 %v1181, 0.0
        %v1248 = vmax.f32 %v1094, 0.0
        %v1249 = vmax.f32 %v1183, 0.0
        %v1250 = vmax.f32 %v1097, 0.0
        %v1251 = vmax.f32 %v1186, 0.0
        %v1252 = vmax.f32 %v1099, 0.0
        %v1253 = vmax.f32 %v1188, 0.0
        %v1254 = vpack.c.bf16 %v1192, %v1190
        %v1255 = vpack.c.bf16 %v1193, %v1191
        %v1256 = vpack.c.bf16 %v1196, %v1194
        %v1257 = vpack.c.bf16 %v1197, %v1195
        %v1258 = vpack.c.bf16 %v1200, %v1198
        %v1259 = vpack.c.bf16 %v1201, %v1199
        %v1260 = vpack.c.bf16 %v1204, %v1202
        %v1261 = vpack.c.bf16 %v1205, %v1203
        %v1262 = vpack.c.bf16 %v1208, %v1206
        %v1263 = vpack.c.bf16 %v1209, %v1207
        %v1264 = vpack.c.bf16 %v1212, %v1210
        %v1265 = vpack.c.bf16 %v1213, %v1211
        %v1266 = vpack.c.bf16 %v1216, %v1214
        %v1267 = vpack.c.bf16 %v1217, %v1215
        %v1268 = vpack.c.bf16 %v1220, %v1218
        %v1269 = vpack.c.bf16 %v1221, %v1219
        %v1270 = vpack.c.bf16 %v1224, %v1222
        %v1271 = vpack.c.bf16 %v1225, %v1223
        %v1272 = vpack.c.bf16 %v1228, %v1226
        %v1273 = vpack.c.bf16 %v1229, %v1227
        %v1274 = vpack.c.bf16 %v1232, %v1230
        %v1275 = vpack.c.bf16 %v1233, %v1231
        %v1276 = vpack.c.bf16 %v1236, %v1234
        %v1277 = vpack.c.bf16 %v1237, %v1235
        %v1278 = vpack.c.bf16 %v1240, %v1238
        %v1279 = vpack.c.bf16 %v1241, %v1239
        %v1280 = vpack.c.bf16 %v1244, %v1242
        %v1281 = vpack.c.bf16 %v1245, %v1243
        %v1282 = vpack.c.bf16 %v1248, %v1246
        %v1283 = vpack.c.bf16 %v1249, %v1247
        %v1284 = vpack.c.bf16 %v1252, %v1250
        %v1285 = vpack.c.bf16 %v1253, %v1251
        %v1286 = vld [vmem:[#allocation10] sm:$0xff]
        %v1287 = vld [vmem:[#allocation10 + $0x8] sm:$0xff]
        %v1288 = vld [vmem:[#allocation10 + $0x10] sm:$0xff]
        %v1289 = vld [vmem:[#allocation10 + $0x18] sm:$0xff]
        %v1290 = vld [vmem:[#allocation10 + $0x20] sm:$0xff]
        %v1291 = vld [vmem:[#allocation10 + $0x28] sm:$0xff]
        %v1292 = vld [vmem:[#allocation10 + $0x30] sm:$0xff]
        %v1293 = vld [vmem:[#allocation10 + $0x38] sm:$0xff]
        %v1294 = vld [vmem:[#allocation10 + $0x40] sm:$0xff]
        %v1295 = vld [vmem:[#allocation10 + $0x48] sm:$0xff]
        %v1296 = vld [vmem:[#allocation10 + $0x50] sm:$0xff]
        %v1297 = vld [vmem:[#allocation10 + $0x58] sm:$0xff]
        %v1298 = vld [vmem:[#allocation10 + $0x60] sm:$0xff]
        %v1299 = vld [vmem:[#allocation10 + $0x68] sm:$0xff]
        %v1300 = vld [vmem:[#allocation10 + $0x70] sm:$0xff]
        %v1301 = vld [vmem:[#allocation10 + $0x78] sm:$0xff]
        %v1302 = vld [vmem:[#allocation10 + $0x80] sm:$0xff]
        %v1303 = vld [vmem:[#allocation10 + $0x88] sm:$0xff]
        %v1304 = vld [vmem:[#allocation10 + $0x90] sm:$0xff]
        %v1305 = vld [vmem:[#allocation10 + $0x98] sm:$0xff]
        %v1306 = vld [vmem:[#allocation10 + $0xa0] sm:$0xff]
        %v1307 = vld [vmem:[#allocation10 + $0xa8] sm:$0xff]
        %v1308 = vld [vmem:[#allocation10 + $0xb0] sm:$0xff]
        %v1309 = vld [vmem:[#allocation10 + $0xb8] sm:$0xff]
        %v1310 = vld [vmem:[#allocation10 + $0xc0] sm:$0xff]
        %v1311 = vld [vmem:[#allocation10 + $0xc8] sm:$0xff]
        %v1312 = vld [vmem:[#allocation10 + $0xd0] sm:$0xff]
        %v1313 = vld [vmem:[#allocation10 + $0xd8] sm:$0xff]
        %v1314 = vld [vmem:[#allocation10 + $0xe0] sm:$0xff]
        %v1315 = vld [vmem:[#allocation10 + $0xe8] sm:$0xff]
        %v1316 = vld [vmem:[#allocation10 + $0xf0] sm:$0xff]
        %v1317 = vld [vmem:[#allocation10 + $0xf8] sm:$0xff]
        %v1318 = vld [vmem:[%s6] sm:$0x3]
        %v1320 = vperm.slane %v1318, 0
        %v1321 = vperm.slane %v1318, 1
        %v1356 = vunpack.c.l.b16 %v1286
        %v1357 = vunpack.c.h.b16 %v1286
        %v1358 = vunpack.c.l.b16 %v1287
        %v1359 = vunpack.c.h.b16 %v1287
        %v1360 = vunpack.c.l.b16 %v1288
        %v1361 = vunpack.c.h.b16 %v1288
        %v1362 = vunpack.c.l.b16 %v1289
        %v1363 = vunpack.c.h.b16 %v1289
        %v1364 = vunpack.c.l.b16 %v1290
        %v1365 = vunpack.c.h.b16 %v1290
        %v1366 = vunpack.c.l.b16 %v1291
        %v1367 = vunpack.c.h.b16 %v1291
        %v1368 = vunpack.c.l.b16 %v1292
        %v1369 = vunpack.c.h.b16 %v1292
        %v1370 = vunpack.c.l.b16 %v1293
        %v1371 = vunpack.c.h.b16 %v1293
        %v1372 = vunpack.c.l.b16 %v1294
        %v1373 = vunpack.c.h.b16 %v1294
        %v1374 = vunpack.c.l.b16 %v1295
        %v1375 = vunpack.c.h.b16 %v1295
        %v1376 = vunpack.c.l.b16 %v1296
        %v1377 = vunpack.c.h.b16 %v1296
        %v1378 = vunpack.c.l.b16 %v1297
        %v1379 = vunpack.c.h.b16 %v1297
        %v1380 = vunpack.c.l.b16 %v1298
        %v1381 = vunpack.c.h.b16 %v1298
        %v1382 = vunpack.c.l.b16 %v1299
        %v1383 = vunpack.c.h.b16 %v1299
        %v1384 = vunpack.c.l.b16 %v1300
        %v1385 = vunpack.c.h.b16 %v1300
        %v1386 = vunpack.c.l.b16 %v1301
        %v1387 = vunpack.c.h.b16 %v1301
        %v1388 = vunpack.c.l.b16 %v1302
        %v1389 = vunpack.c.h.b16 %v1302
        %v1390 = vunpack.c.l.b16 %v1303
        %v1391 = vunpack.c.h.b16 %v1303
        %v1392 = vunpack.c.l.b16 %v1304
        %v1393 = vunpack.c.h.b16 %v1304
        %v1394 = vunpack.c.l.b16 %v1305
        %v1395 = vunpack.c.h.b16 %v1305
        %v1396 = vunpack.c.l.b16 %v1306
        %v1397 = vunpack.c.h.b16 %v1306
        %v1398 = vunpack.c.l.b16 %v1307
        %v1399 = vunpack.c.h.b16 %v1307
        %v1400 = vunpack.c.l.b16 %v1308
        %v1401 = vunpack.c.h.b16 %v1308
        %v1402 = vunpack.c.l.b16 %v1309
        %v1403 = vunpack.c.h.b16 %v1309
        %v1404 = vunpack.c.l.b16 %v1310
        %v1405 = vunpack.c.h.b16 %v1310
        %v1406 = vunpack.c.l.b16 %v1311
        %v1407 = vunpack.c.h.b16 %v1311
        %v1408 = vunpack.c.l.b16 %v1312
        %v1409 = vunpack.c.h.b16 %v1312
        %v1410 = vunpack.c.l.b16 %v1313
        %v1411 = vunpack.c.h.b16 %v1313
        %v1412 = vunpack.c.l.b16 %v1314
        %v1413 = vunpack.c.h.b16 %v1314
        %v1414 = vunpack.c.l.b16 %v1315
        %v1415 = vunpack.c.h.b16 %v1315
        %v1416 = vunpack.c.l.b16 %v1316
        %v1417 = vunpack.c.h.b16 %v1316
        %v1418 = vunpack.c.l.b16 %v1317
        %v1419 = vunpack.c.h.b16 %v1317
        %v1420 = vpack.c.b16 %v1358, %v1356
        %v1421 = vpack.c.b16 %v1359, %v1357
        %v1422 = vpack.c.b16 %v1362, %v1360
        %v1423 = vpack.c.b16 %v1363, %v1361
        %v1424 = vpack.c.b16 %v1366, %v1364
        %v1425 = vpack.c.b16 %v1367, %v1365
        %v1426 = vpack.c.b16 %v1370, %v1368
        %v1427 = vpack.c.b16 %v1371, %v1369
        %v1428 = vpack.c.b16 %v1374, %v1372
        %v1429 = vpack.c.b16 %v1375, %v1373
        %v1430 = vpack.c.b16 %v1378, %v1376
        %v1431 = vpack.c.b16 %v1379, %v1377
        %v1432 = vpack.c.b16 %v1382, %v1380
        %v1433 = vpack.c.b16 %v1383, %v1381
        %v1434 = vpack.c.b16 %v1386, %v1384
        %v1435 = vpack.c.b16 %v1387, %v1385
        %v1436 = vpack.c.b16 %v1390, %v1388
        %v1437 = vpack.c.b16 %v1391, %v1389
        %v1438 = vpack.c.b16 %v1394, %v1392
        %v1439 = vpack.c.b16 %v1395, %v1393
        %v1440 = vpack.c.b16 %v1398, %v1396
        %v1441 = vpack.c.b16 %v1399, %v1397
        %v1442 = vpack.c.b16 %v1402, %v1400
        %v1443 = vpack.c.b16 %v1403, %v1401
        %v1444 = vpack.c.b16 %v1406, %v1404
        %v1445 = vpack.c.b16 %v1407, %v1405
        %v1446 = vpack.c.b16 %v1410, %v1408
        %v1447 = vpack.c.b16 %v1411, %v1409
        %v1448 = vpack.c.b16 %v1414, %v1412
        %v1449 = vpack.c.b16 %v1415, %v1413
        %v1450 = vpack.c.b16 %v1418, %v1416
        %v1451 = vpack.c.b16 %v1419, %v1417
        %1484 = vmatpush.bf16.msra.mxu0 %v1434
        %1485 = vmatpush.bf16.msra.mxu0 %v1432
        %1486 = vmatpush.bf16.msra.mxu0 %v1430
        %1487 = vmatpush.bf16.msra.mxu0 %v1428
        %1488 = vmatpush.bf16.msra.mxu0 %v1426
        %1489 = vmatpush.bf16.msra.mxu0 %v1424
        %1490 = vmatpush.bf16.msra.mxu0 %v1422
        %1491 = vmatpush.bf16.msra.mxu0 %v1420
        %1492 = vmatmul.bf16.gmra.mxu0 %v1254
        %v1493 = vpop.f32.mrf.mxu0
        %v1494 = vadd.f32 %v1320, %v1493
        %v1495 = vpop.f32.mrf.mxu0
        %v1496 = vadd.f32 %v1320, %v1495
        %1497 = vmatmul.bf16.gmra.mxu0 %v1256
        %v1498 = vpop.f32.mrf.mxu0
        %v1499 = vadd.f32 %v1320, %v1498
        %v1500 = vpop.f32.mrf.mxu0
        %v1501 = vadd.f32 %v1320, %v1500
        %1502 = vmatmul.bf16.gmra.mxu0 %v1258
        %v1503 = vpop.f32.mrf.mxu0
        %v1504 = vadd.f32 %v1320, %v1503
        %v1505 = vpop.f32.mrf.mxu0
        %v1506 = vadd.f32 %v1320, %v1505
        %1507 = vmatmul.bf16.gmra.mxu0 %v1260
        %v1508 = vpop.f32.mrf.mxu0
        %v1509 = vadd.f32 %v1320, %v1508
        %v1510 = vpop.f32.mrf.mxu0
        %v1511 = vadd.f32 %v1320, %v1510
        %1512 = vmatmul.bf16.gmra.mxu0 %v1262
        %v1513 = vpop.f32.mrf.mxu0
        %v1514 = vadd.f32 %v1320, %v1513
        %v1515 = vpop.f32.mrf.mxu0
        %v1516 = vadd.f32 %v1320, %v1515
        %1517 = vmatmul.bf16.gmra.mxu0 %v1264
        %v1518 = vpop.f32.mrf.mxu0
        %v1519 = vadd.f32 %v1320, %v1518
        %v1520 = vpop.f32.mrf.mxu0
        %v1521 = vadd.f32 %v1320, %v1520
        %1522 = vmatmul.bf16.gmra.mxu0 %v1266
        %v1523 = vpop.f32.mrf.mxu0
        %v1524 = vadd.f32 %v1320, %v1523
        %v1525 = vpop.f32.mrf.mxu0
        %v1526 = vadd.f32 %v1320, %v1525
        %1527 = vmatmul.bf16.gmra.mxu0 %v1268
        %v1528 = vpop.f32.mrf.mxu0
        %v1529 = vadd.f32 %v1320, %v1528
        %v1530 = vpop.f32.mrf.mxu0
        %v1531 = vadd.f32 %v1320, %v1530
        %1532 = vmatmul.bf16.gmra.mxu0 %v1270
        %v1533 = vpop.f32.mrf.mxu0
        %v1534 = vadd.f32 %v1320, %v1533
        %v1535 = vpop.f32.mrf.mxu0
        %v1536 = vadd.f32 %v1320, %v1535
        %1537 = vmatmul.bf16.gmra.mxu0 %v1272
        %v1538 = vpop.f32.mrf.mxu0
        %v1539 = vadd.f32 %v1320, %v1538
        %v1540 = vpop.f32.mrf.mxu0
        %v1541 = vadd.f32 %v1320, %v1540
        %1542 = vmatmul.bf16.gmra.mxu0 %v1274
        %v1543 = vpop.f32.mrf.mxu0
        %v1544 = vadd.f32 %v1320, %v1543
        %v1545 = vpop.f32.mrf.mxu0
        %v1546 = vadd.f32 %v1320, %v1545
        %1547 = vmatmul.bf16.gmra.mxu0 %v1276
        %v1548 = vpop.f32.mrf.mxu0
        %v1549 = vadd.f32 %v1320, %v1548
        %v1550 = vpop.f32.mrf.mxu0
        %v1551 = vadd.f32 %v1320, %v1550
        %1552 = vmatmul.bf16.gmra.mxu0 %v1278
        %v1553 = vpop.f32.mrf.mxu0
        %v1554 = vadd.f32 %v1320, %v1553
        %v1555 = vpop.f32.mrf.mxu0
        %v1556 = vadd.f32 %v1320, %v1555
        %1557 = vmatmul.bf16.gmra.mxu0 %v1280
        %v1558 = vpop.f32.mrf.mxu0
        %v1559 = vadd.f32 %v1320, %v1558
        %v1560 = vpop.f32.mrf.mxu0
        %v1561 = vadd.f32 %v1320, %v1560
        %1562 = vmatmul.bf16.gmra.mxu0 %v1282
        %v1563 = vpop.f32.mrf.mxu0
        %v1564 = vadd.f32 %v1320, %v1563
        %v1565 = vpop.f32.mrf.mxu0
        %v1566 = vadd.f32 %v1320, %v1565
        %1567 = vmatmul.bf16.gmra.mxu0 %v1284
        %v1568 = vpop.f32.mrf.mxu0
        %v1569 = vadd.f32 %v1320, %v1568
        %v1570 = vpop.f32.mrf.mxu0
        %v1571 = vadd.f32 %v1320, %v1570
        %1572 = vdwg.mxu0
        %1573 = vmatpush.bf16.msra.mxu0 %v1450
        %1574 = vmatpush.bf16.msra.mxu0 %v1448
        %1575 = vmatpush.bf16.msra.mxu0 %v1446
        %1576 = vmatpush.bf16.msra.mxu0 %v1444
        %1577 = vmatpush.bf16.msra.mxu0 %v1442
        %1578 = vmatpush.bf16.msra.mxu0 %v1440
        %1579 = vmatpush.bf16.msra.mxu0 %v1438
        %1580 = vmatpush.bf16.msra.mxu0 %v1436
        %1581 = vmatmul.bf16.gmra.mxu0 %v1255
        %v1582 = vpop.f32.mrf.mxu0
        %v1583 = vadd.f32 %v1494, %v1582
        %v1584 = vpop.f32.mrf.mxu0
        %v1585 = vadd.f32 %v1496, %v1584
        %1586 = vmatmul.bf16.gmra.mxu0 %v1257
        %v1587 = vpop.f32.mrf.mxu0
        %v1588 = vadd.f32 %v1499, %v1587
        %v1589 = vpop.f32.mrf.mxu0
        %v1590 = vadd.f32 %v1501, %v1589
        %1591 = vmatmul.bf16.gmra.mxu0 %v1259
        %v1592 = vpop.f32.mrf.mxu0
        %v1593 = vadd.f32 %v1504, %v1592
        %v1594 = vpop.f32.mrf.mxu0
        %v1595 = vadd.f32 %v1506, %v1594
        %1596 = vmatmul.bf16.gmra.mxu0 %v1261
        %v1597 = vpop.f32.mrf.mxu0
        %v1598 = vadd.f32 %v1509, %v1597
        %v1599 = vpop.f32.mrf.mxu0
        %v1600 = vadd.f32 %v1511, %v1599
        %1601 = vmatmul.bf16.gmra.mxu0 %v1263
        %v1602 = vpop.f32.mrf.mxu0
        %v1603 = vadd.f32 %v1514, %v1602
        %v1604 = vpop.f32.mrf.mxu0
        %v1605 = vadd.f32 %v1516, %v1604
        %1606 = vmatmul.bf16.gmra.mxu0 %v1265
        %v1607 = vpop.f32.mrf.mxu0
        %v1608 = vadd.f32 %v1519, %v1607
        %v1609 = vpop.f32.mrf.mxu0
        %v1610 = vadd.f32 %v1521, %v1609
        %1611 = vmatmul.bf16.gmra.mxu0 %v1267
        %v1612 = vpop.f32.mrf.mxu0
        %v1613 = vadd.f32 %v1524, %v1612
        %v1614 = vpop.f32.mrf.mxu0
        %v1615 = vadd.f32 %v1526, %v1614
        %1616 = vmatmul.bf16.gmra.mxu0 %v1269
        %v1617 = vpop.f32.mrf.mxu0
        %v1618 = vadd.f32 %v1529, %v1617
        %v1619 = vpop.f32.mrf.mxu0
        %v1620 = vadd.f32 %v1531, %v1619
        %1621 = vmatmul.bf16.gmra.mxu0 %v1271
        %v1622 = vpop.f32.mrf.mxu0
        %v1623 = vadd.f32 %v1534, %v1622
        %v1624 = vpop.f32.mrf.mxu0
        %v1625 = vadd.f32 %v1536, %v1624
        %1626 = vmatmul.bf16.gmra.mxu0 %v1273
        %v1627 = vpop.f32.mrf.mxu0
        %v1628 = vadd.f32 %v1539, %v1627
        %v1629 = vpop.f32.mrf.mxu0
        %v1630 = vadd.f32 %v1541, %v1629
        %1631 = vmatmul.bf16.gmra.mxu0 %v1275
        %v1632 = vpop.f32.mrf.mxu0
        %v1633 = vadd.f32 %v1544, %v1632
        %v1634 = vpop.f32.mrf.mxu0
        %v1635 = vadd.f32 %v1546, %v1634
        %1636 = vmatmul.bf16.gmra.mxu0 %v1277
        %v1637 = vpop.f32.mrf.mxu0
        %v1638 = vadd.f32 %v1549, %v1637
        %v1639 = vpop.f32.mrf.mxu0
        %v1640 = vadd.f32 %v1551, %v1639
        %1641 = vmatmul.bf16.gmra.mxu0 %v1279
        %v1642 = vpop.f32.mrf.mxu0
        %v1643 = vadd.f32 %v1554, %v1642
        %v1644 = vpop.f32.mrf.mxu0
        %v1645 = vadd.f32 %v1556, %v1644
        %1646 = vmatmul.bf16.gmra.mxu0 %v1281
        %v1647 = vpop.f32.mrf.mxu0
        %v1648 = vadd.f32 %v1559, %v1647
        %v1649 = vpop.f32.mrf.mxu0
        %v1650 = vadd.f32 %v1561, %v1649
        %1651 = vmatmul.bf16.gmra.mxu0 %v1283
        %v1652 = vpop.f32.mrf.mxu0
        %v1653 = vadd.f32 %v1564, %v1652
        %v1654 = vpop.f32.mrf.mxu0
        %v1655 = vadd.f32 %v1566, %v1654
        %1656 = vmatmul.bf16.gmra.mxu0 %v1285
        %v1657 = vpop.f32.mrf.mxu0
        %v1658 = vadd.f32 %v1569, %v1657
        %v1659 = vpop.f32.mrf.mxu0
        %v1660 = vadd.f32 %v1571, %v1659
        %1661 = vdwg.mxu0
        %1662 = vmatpush.bf16.msra.mxu0 %v1435
        %1663 = vmatpush.bf16.msra.mxu0 %v1433
        %1664 = vmatpush.bf16.msra.mxu0 %v1431
        %1665 = vmatpush.bf16.msra.mxu0 %v1429
        %1666 = vmatpush.bf16.msra.mxu0 %v1427
        %1667 = vmatpush.bf16.msra.mxu0 %v1425
        %1668 = vmatpush.bf16.msra.mxu0 %v1423
        %1669 = vmatpush.bf16.msra.mxu0 %v1421
        %1670 = vmatmul.bf16.gmra.mxu0 %v1254
        %v1671 = vpop.f32.mrf.mxu0
        %v1672 = vadd.f32 %v1321, %v1671
        %v1673 = vpop.f32.mrf.mxu0
        %v1674 = vadd.f32 %v1321, %v1673
        %1675 = vmatmul.bf16.gmra.mxu0 %v1256
        %v1676 = vpop.f32.mrf.mxu0
        %v1677 = vadd.f32 %v1321, %v1676
        %v1678 = vpop.f32.mrf.mxu0
        %v1679 = vadd.f32 %v1321, %v1678
        %1680 = vmatmul.bf16.gmra.mxu0 %v1258
        %v1681 = vpop.f32.mrf.mxu0
        %v1682 = vadd.f32 %v1321, %v1681
        %v1683 = vpop.f32.mrf.mxu0
        %v1684 = vadd.f32 %v1321, %v1683
        %1685 = vmatmul.bf16.gmra.mxu0 %v1260
        %v1686 = vpop.f32.mrf.mxu0
        %v1687 = vadd.f32 %v1321, %v1686
        %v1688 = vpop.f32.mrf.mxu0
        %v1689 = vadd.f32 %v1321, %v1688
        %1690 = vmatmul.bf16.gmra.mxu0 %v1262
        %v1691 = vpop.f32.mrf.mxu0
        %v1692 = vadd.f32 %v1321, %v1691
        %v1693 = vpop.f32.mrf.mxu0
        %v1694 = vadd.f32 %v1321, %v1693
        %1695 = vmatmul.bf16.gmra.mxu0 %v1264
        %v1696 = vpop.f32.mrf.mxu0
        %v1697 = vadd.f32 %v1321, %v1696
        %v1698 = vpop.f32.mrf.mxu0
        %v1699 = vadd.f32 %v1321, %v1698
        %1700 = vmatmul.bf16.gmra.mxu0 %v1266
        %v1701 = vpop.f32.mrf.mxu0
        %v1702 = vadd.f32 %v1321, %v1701
        %v1703 = vpop.f32.mrf.mxu0
        %v1704 = vadd.f32 %v1321, %v1703
        %1705 = vmatmul.bf16.gmra.mxu0 %v1268
        %v1706 = vpop.f32.mrf.mxu0
        %v1707 = vadd.f32 %v1321, %v1706
        %v1708 = vpop.f32.mrf.mxu0
        %v1709 = vadd.f32 %v1321, %v1708
        %1710 = vmatmul.bf16.gmra.mxu0 %v1270
        %v1711 = vpop.f32.mrf.mxu0
        %v1712 = vadd.f32 %v1321, %v1711
        %v1713 = vpop.f32.mrf.mxu0
        %v1714 = vadd.f32 %v1321, %v1713
        %1715 = vmatmul.bf16.gmra.mxu0 %v1272
        %v1716 = vpop.f32.mrf.mxu0
        %v1717 = vadd.f32 %v1321, %v1716
        %v1718 = vpop.f32.mrf.mxu0
        %v1719 = vadd.f32 %v1321, %v1718
        %1720 = vmatmul.bf16.gmra.mxu0 %v1274
        %v1721 = vpop.f32.mrf.mxu0
        %v1722 = vadd.f32 %v1321, %v1721
        %v1723 = vpop.f32.mrf.mxu0
        %v1724 = vadd.f32 %v1321, %v1723
        %1725 = vmatmul.bf16.gmra.mxu0 %v1276
        %v1726 = vpop.f32.mrf.mxu0
        %v1727 = vadd.f32 %v1321, %v1726
        %v1728 = vpop.f32.mrf.mxu0
        %v1729 = vadd.f32 %v1321, %v1728
        %1730 = vmatmul.bf16.gmra.mxu0 %v1278
        %v1731 = vpop.f32.mrf.mxu0
        %v1732 = vadd.f32 %v1321, %v1731
        %v1733 = vpop.f32.mrf.mxu0
        %v1734 = vadd.f32 %v1321, %v1733
        %1735 = vmatmul.bf16.gmra.mxu0 %v1280
        %v1736 = vpop.f32.mrf.mxu0
        %v1737 = vadd.f32 %v1321, %v1736
        %v1738 = vpop.f32.mrf.mxu0
        %v1739 = vadd.f32 %v1321, %v1738
        %1740 = vmatmul.bf16.gmra.mxu0 %v1282
        %v1741 = vpop.f32.mrf.mxu0
        %v1742 = vadd.f32 %v1321, %v1741
        %v1743 = vpop.f32.mrf.mxu0
        %v1744 = vadd.f32 %v1321, %v1743
        %1745 = vmatmul.bf16.gmra.mxu0 %v1284
        %v1746 = vpop.f32.mrf.mxu0
        %v1747 = vadd.f32 %v1321, %v1746
        %v1748 = vpop.f32.mrf.mxu0
        %v1749 = vadd.f32 %v1321, %v1748
        %1750 = vdwg.mxu0
        %1751 = vmatpush.bf16.msra.mxu0 %v1451
        %1752 = vmatpush.bf16.msra.mxu0 %v1449
        %1753 = vmatpush.bf16.msra.mxu0 %v1447
        %1754 = vmatpush.bf16.msra.mxu0 %v1445
        %1755 = vmatpush.bf16.msra.mxu0 %v1443
        %1756 = vmatpush.bf16.msra.mxu0 %v1441
        %1757 = vmatpush.bf16.msra.mxu0 %v1439
        %1758 = vmatpush.bf16.msra.mxu0 %v1437
        %1759 = vmatmul.bf16.gmra.mxu0 %v1255
        %v1760 = vpop.f32.mrf.mxu0
        %v1761 = vadd.f32 %v1672, %v1760
        %v1762 = vpop.f32.mrf.mxu0
        %v1763 = vadd.f32 %v1674, %v1762
        %1764 = vmatmul.bf16.gmra.mxu0 %v1257
        %v1765 = vpop.f32.mrf.mxu0
        %v1766 = vadd.f32 %v1677, %v1765
        %v1767 = vpop.f32.mrf.mxu0
        %v1768 = vadd.f32 %v1679, %v1767
        %1769 = vmatmul.bf16.gmra.mxu0 %v1259
        %v1770 = vpop.f32.mrf.mxu0
        %v1771 = vadd.f32 %v1682, %v1770
        %v1772 = vpop.f32.mrf.mxu0
        %v1773 = vadd.f32 %v1684, %v1772
        %1774 = vmatmul.bf16.gmra.mxu0 %v1261
        %v1775 = vpop.f32.mrf.mxu0
        %v1776 = vadd.f32 %v1687, %v1775
        %v1777 = vpop.f32.mrf.mxu0
        %v1778 = vadd.f32 %v1689, %v1777
        %1779 = vmatmul.bf16.gmra.mxu0 %v1263
        %v1780 = vpop.f32.mrf.mxu0
        %v1781 = vadd.f32 %v1692, %v1780
        %v1782 = vpop.f32.mrf.mxu0
        %v1783 = vadd.f32 %v1694, %v1782
        %1784 = vmatmul.bf16.gmra.mxu0 %v1265
        %v1785 = vpop.f32.mrf.mxu0
        %v1786 = vadd.f32 %v1697, %v1785
        %v1787 = vpop.f32.mrf.mxu0
        %v1788 = vadd.f32 %v1699, %v1787
        %1789 = vmatmul.bf16.gmra.mxu0 %v1267
        %v1790 = vpop.f32.mrf.mxu0
        %v1791 = vadd.f32 %v1702, %v1790
        %v1792 = vpop.f32.mrf.mxu0
        %v1793 = vadd.f32 %v1704, %v1792
        %1794 = vmatmul.bf16.gmra.mxu0 %v1269
        %v1795 = vpop.f32.mrf.mxu0
        %v1796 = vadd.f32 %v1707, %v1795
        %v1797 = vpop.f32.mrf.mxu0
        %v1798 = vadd.f32 %v1709, %v1797
        %1799 = vmatmul.bf16.gmra.mxu0 %v1271
        %v1800 = vpop.f32.mrf.mxu0
        %v1801 = vadd.f32 %v1712, %v1800
        %v1802 = vpop.f32.mrf.mxu0
        %v1803 = vadd.f32 %v1714, %v1802
        %1804 = vmatmul.bf16.gmra.mxu0 %v1273
        %v1805 = vpop.f32.mrf.mxu0
        %v1806 = vadd.f32 %v1717, %v1805
        %v1807 = vpop.f32.mrf.mxu0
        %v1808 = vadd.f32 %v1719, %v1807
        %1809 = vmatmul.bf16.gmra.mxu0 %v1275
        %v1810 = vpop.f32.mrf.mxu0
        %v1811 = vadd.f32 %v1722, %v1810
        %v1812 = vpop.f32.mrf.mxu0
        %v1813 = vadd.f32 %v1724, %v1812
        %1814 = vmatmul.bf16.gmra.mxu0 %v1277
        %v1815 = vpop.f32.mrf.mxu0
        %v1816 = vadd.f32 %v1727, %v1815
        %v1817 = vpop.f32.mrf.mxu0
        %v1818 = vadd.f32 %v1729, %v1817
        %1819 = vmatmul.bf16.gmra.mxu0 %v1279
        %v1820 = vpop.f32.mrf.mxu0
        %v1821 = vadd.f32 %v1732, %v1820
        %v1822 = vpop.f32.mrf.mxu0
        %v1823 = vadd.f32 %v1734, %v1822
        %1824 = vmatmul.bf16.gmra.mxu0 %v1281
        %v1825 = vpop.f32.mrf.mxu0
        %v1826 = vadd.f32 %v1737, %v1825
        %v1827 = vpop.f32.mrf.mxu0
        %v1828 = vadd.f32 %v1739, %v1827
        %1829 = vmatmul.bf16.gmra.mxu0 %v1283
        %v1830 = vpop.f32.mrf.mxu0
        %v1831 = vadd.f32 %v1742, %v1830
        %v1832 = vpop.f32.mrf.mxu0
        %v1833 = vadd.f32 %v1744, %v1832
        %1834 = vmatmul.bf16.gmra.mxu0 %v1285
        %v1835 = vpop.f32.mrf.mxu0
        %v1836 = vadd.f32 %v1747, %v1835
        %v1837 = vpop.f32.mrf.mxu0
        %v1838 = vadd.f32 %v1749, %v1837
        %1839 = vdwg.mxu0
        %v1840 = vmax.f32 %v1583, 0.0
        %v1841 = vmax.f32 %v1761, 0.0
        %v1842 = vmax.f32 %v1585, 0.0
        %v1843 = vmax.f32 %v1763, 0.0
        %v1844 = vmax.f32 %v1588, 0.0
        %v1845 = vmax.f32 %v1766, 0.0
        %v1846 = vmax.f32 %v1590, 0.0
        %v1847 = vmax.f32 %v1768, 0.0
        %v1848 = vmax.f32 %v1593, 0.0
        %v1849 = vmax.f32 %v1771, 0.0
        %v1850 = vmax.f32 %v1595, 0.0
        %v1851 = vmax.f32 %v1773, 0.0
        %v1852 = vmax.f32 %v1598, 0.0
        %v1853 = vmax.f32 %v1776, 0.0
        %v1854 = vmax.f32 %v1600, 0.0
        %v1855 = vmax.f32 %v1778, 0.0
        %v1856 = vmax.f32 %v1603, 0.0
        %v1857 = vmax.f32 %v1781, 0.0
        %v1858 = vmax.f32 %v1605, 0.0
        %v1859 = vmax.f32 %v1783, 0.0
        %v1860 = vmax.f32 %v1608, 0.0
        %v1861 = vmax.f32 %v1786, 0.0
        %v1862 = vmax.f32 %v1610, 0.0
        %v1863 = vmax.f32 %v1788, 0.0
        %v1864 = vmax.f32 %v1613, 0.0
        %v1865 = vmax.f32 %v1791, 0.0
        %v1866 = vmax.f32 %v1615, 0.0
        %v1867 = vmax.f32 %v1793, 0.0
        %v1868 = vmax.f32 %v1618, 0.0
        %v1869 = vmax.f32 %v1796, 0.0
        %v1870 = vmax.f32 %v1620, 0.0
        %v1871 = vmax.f32 %v1798, 0.0
        %v1872 = vmax.f32 %v1623, 0.0
        %v1873 = vmax.f32 %v1801, 0.0
        %v1874 = vmax.f32 %v1625, 0.0
        %v1875 = vmax.f32 %v1803, 0.0
        %v1876 = vmax.f32 %v1628, 0.0
        %v1877 = vmax.f32 %v1806, 0.0
        %v1878 = vmax.f32 %v1630, 0.0
        %v1879 = vmax.f32 %v1808, 0.0
        %v1880 = vmax.f32 %v1633, 0.0
        %v1881 = vmax.f32 %v1811, 0.0
        %v1882 = vmax.f32 %v1635, 0.0
        %v1883 = vmax.f32 %v1813, 0.0
        %v1884 = vmax.f32 %v1638, 0.0
        %v1885 = vmax.f32 %v1816, 0.0
        %v1886 = vmax.f32 %v1640, 0.0
        %v1887 = vmax.f32 %v1818, 0.0
        %v1888 = vmax.f32 %v1643, 0.0
        %v1889 = vmax.f32 %v1821, 0.0
        %v1890 = vmax.f32 %v1645, 0.0
        %v1891 = vmax.f32 %v1823, 0.0
        %v1892 = vmax.f32 %v1648, 0.0
        %v1893 = vmax.f32 %v1826, 0.0
        %v1894 = vmax.f32 %v1650, 0.0
        %v1895 = vmax.f32 %v1828, 0.0
        %v1896 = vmax.f32 %v1653, 0.0
        %v1897 = vmax.f32 %v1831, 0.0
        %v1898 = vmax.f32 %v1655, 0.0
        %v1899 = vmax.f32 %v1833, 0.0
        %v1900 = vmax.f32 %v1658, 0.0
        %v1901 = vmax.f32 %v1836, 0.0
        %v1902 = vmax.f32 %v1660, 0.0
        %v1903 = vmax.f32 %v1838, 0.0
        %v1904 = vpack.c.bf16 %v1842, %v1840
        %v1905 = vpack.c.bf16 %v1843, %v1841
        %v1906 = vpack.c.bf16 %v1846, %v1844
        %v1907 = vpack.c.bf16 %v1847, %v1845
        %v1908 = vpack.c.bf16 %v1850, %v1848
        %v1909 = vpack.c.bf16 %v1851, %v1849
        %v1910 = vpack.c.bf16 %v1854, %v1852
        %v1911 = vpack.c.bf16 %v1855, %v1853
        %v1912 = vpack.c.bf16 %v1858, %v1856
        %v1913 = vpack.c.bf16 %v1859, %v1857
        %v1914 = vpack.c.bf16 %v1862, %v1860
        %v1915 = vpack.c.bf16 %v1863, %v1861
        %v1916 = vpack.c.bf16 %v1866, %v1864
        %v1917 = vpack.c.bf16 %v1867, %v1865
        %v1918 = vpack.c.bf16 %v1870, %v1868
        %v1919 = vpack.c.bf16 %v1871, %v1869
        %v1920 = vpack.c.bf16 %v1874, %v1872
        %v1921 = vpack.c.bf16 %v1875, %v1873
        %v1922 = vpack.c.bf16 %v1878, %v1876
        %v1923 = vpack.c.bf16 %v1879, %v1877
        %v1924 = vpack.c.bf16 %v1882, %v1880
        %v1925 = vpack.c.bf16 %v1883, %v1881
        %v1926 = vpack.c.bf16 %v1886, %v1884
        %v1927 = vpack.c.bf16 %v1887, %v1885
        %v1928 = vpack.c.bf16 %v1890, %v1888
        %v1929 = vpack.c.bf16 %v1891, %v1889
        %v1930 = vpack.c.bf16 %v1894, %v1892
        %v1931 = vpack.c.bf16 %v1895, %v1893
        %v1932 = vpack.c.bf16 %v1898, %v1896
        %v1933 = vpack.c.bf16 %v1899, %v1897
        %v1934 = vpack.c.bf16 %v1902, %v1900
        %v1935 = vpack.c.bf16 %v1903, %v1901
        %v1936 = vld [vmem:[#allocation11] sm:$0xf]
        %v1937 = vld [vmem:[#allocation11 + $0x4] sm:$0xf]
        %v1938 = vld [vmem:[#allocation11 + $0x8] sm:$0xf]
        %v1939 = vld [vmem:[#allocation11 + $0xc] sm:$0xf]
        %v1940 = vld [vmem:[#allocation11 + $0x10] sm:$0xf]
        %v1941 = vld [vmem:[#allocation11 + $0x14] sm:$0xf]
        %v1942 = vld [vmem:[#allocation11 + $0x18] sm:$0xf]
        %v1943 = vld [vmem:[#allocation11 + $0x1c] sm:$0xf]
        %v1944 = vld [vmem:[#allocation11 + $0x20] sm:$0xf]
        %v1945 = vld [vmem:[#allocation11 + $0x24] sm:$0xf]
        %v1946 = vld [vmem:[#allocation11 + $0x28] sm:$0xf]
        %v1947 = vld [vmem:[#allocation11 + $0x2c] sm:$0xf]
        %v1948 = vld [vmem:[#allocation11 + $0x30] sm:$0xf]
        %v1949 = vld [vmem:[#allocation11 + $0x34] sm:$0xf]
        %v1950 = vld [vmem:[#allocation11 + $0x38] sm:$0xf]
        %v1951 = vld [vmem:[#allocation11 + $0x3c] sm:$0xf]
        %v1952 = vld [vmem:[#allocation11 + $0x40] sm:$0xf]
        %v1953 = vld [vmem:[#allocation11 + $0x44] sm:$0xf]
        %v1954 = vld [vmem:[#allocation11 + $0x48] sm:$0xf]
        %v1955 = vld [vmem:[#allocation11 + $0x4c] sm:$0xf]
        %v1956 = vld [vmem:[#allocation11 + $0x50] sm:$0xf]
        %v1957 = vld [vmem:[#allocation11 + $0x54] sm:$0xf]
        %v1958 = vld [vmem:[#allocation11 + $0x58] sm:$0xf]
        %v1959 = vld [vmem:[#allocation11 + $0x5c] sm:$0xf]
        %v1960 = vld [vmem:[#allocation11 + $0x60] sm:$0xf]
        %v1961 = vld [vmem:[#allocation11 + $0x64] sm:$0xf]
        %v1962 = vld [vmem:[#allocation11 + $0x68] sm:$0xf]
        %v1963 = vld [vmem:[#allocation11 + $0x6c] sm:$0xf]
        %v1964 = vld [vmem:[#allocation11 + $0x70] sm:$0xf]
        %v1965 = vld [vmem:[#allocation11 + $0x74] sm:$0xf]
        %v1966 = vld [vmem:[#allocation11 + $0x78] sm:$0xf]
        %v1967 = vld [vmem:[#allocation11 + $0x7c] sm:$0xf]
        %v1968 = vld [vmem:[%s8] sm:$0x1]
        %v1970 = vperm.slane %v1968, 0
        %v2004 = vunpack.c.l.b16 %v1936
        %v2005 = vunpack.c.l.b16 %v1937
        %v2006 = vunpack.c.l.b16 %v1938
        %v2007 = vunpack.c.l.b16 %v1939
        %v2008 = vunpack.c.l.b16 %v1940
        %v2009 = vunpack.c.l.b16 %v1941
        %v2010 = vunpack.c.l.b16 %v1942
        %v2011 = vunpack.c.l.b16 %v1943
        %v2012 = vunpack.c.l.b16 %v1944
        %v2013 = vunpack.c.l.b16 %v1945
        %v2014 = vunpack.c.l.b16 %v1946
        %v2015 = vunpack.c.l.b16 %v1947
        %v2016 = vunpack.c.l.b16 %v1948
        %v2017 = vunpack.c.l.b16 %v1949
        %v2018 = vunpack.c.l.b16 %v1950
        %v2019 = vunpack.c.l.b16 %v1951
        %v2020 = vunpack.c.l.b16 %v1952
        %v2021 = vunpack.c.l.b16 %v1953
        %v2022 = vunpack.c.l.b16 %v1954
        %v2023 = vunpack.c.l.b16 %v1955
        %v2024 = vunpack.c.l.b16 %v1956
        %v2025 = vunpack.c.l.b16 %v1957
        %v2026 = vunpack.c.l.b16 %v1958
        %v2027 = vunpack.c.l.b16 %v1959
        %v2028 = vunpack.c.l.b16 %v1960
        %v2029 = vunpack.c.l.b16 %v1961
        %v2030 = vunpack.c.l.b16 %v1962
        %v2031 = vunpack.c.l.b16 %v1963
        %v2032 = vunpack.c.l.b16 %v1964
        %v2033 = vunpack.c.l.b16 %v1965
        %v2034 = vunpack.c.l.b16 %v1966
        %v2035 = vunpack.c.l.b16 %v1967
        %v2036 = vpack.c.b16 %v2005, %v2004
        %v2037 = vpack.c.b16 %v2007, %v2006
        %v2038 = vpack.c.b16 %v2009, %v2008
        %v2039 = vpack.c.b16 %v2011, %v2010
        %v2040 = vpack.c.b16 %v2013, %v2012
        %v2041 = vpack.c.b16 %v2015, %v2014
        %v2042 = vpack.c.b16 %v2017, %v2016
        %v2043 = vpack.c.b16 %v2019, %v2018
        %v2044 = vpack.c.b16 %v2021, %v2020
        %v2045 = vpack.c.b16 %v2023, %v2022
        %v2046 = vpack.c.b16 %v2025, %v2024
        %v2047 = vpack.c.b16 %v2027, %v2026
        %v2048 = vpack.c.b16 %v2029, %v2028
        %v2049 = vpack.c.b16 %v2031, %v2030
        %v2050 = vpack.c.b16 %v2033, %v2032
        %v2051 = vpack.c.b16 %v2035, %v2034
        %2068 = vmatpush.bf16.msra.mxu0 %v2043
        %2069 = vmatpush.bf16.msra.mxu0 %v2042
        %2070 = vmatpush.bf16.msra.mxu0 %v2041
        %2071 = vmatpush.bf16.msra.mxu0 %v2040
        %2072 = vmatpush.bf16.msra.mxu0 %v2039
        %2073 = vmatpush.bf16.msra.mxu0 %v2038
        %2074 = vmatpush.bf16.msra.mxu0 %v2037
        %2075 = vmatpush.bf16.msra.mxu0 %v2036
        %2076 = vmatmul.bf16.gmra.mxu0 %v1904
        %v2077 = vpop.f32.mrf.mxu0
        %v2078 = vadd.f32 %v1970, %v2077
        %v2079 = vpop.f32.mrf.mxu0
        %v2080 = vadd.f32 %v1970, %v2079
        %2081 = vmatmul.bf16.gmra.mxu0 %v1906
        %v2082 = vpop.f32.mrf.mxu0
        %v2083 = vadd.f32 %v1970, %v2082
        %v2084 = vpop.f32.mrf.mxu0
        %v2085 = vadd.f32 %v1970, %v2084
        %2086 = vmatmul.bf16.gmra.mxu0 %v1908
        %v2087 = vpop.f32.mrf.mxu0
        %v2088 = vadd.f32 %v1970, %v2087
        %v2089 = vpop.f32.mrf.mxu0
        %v2090 = vadd.f32 %v1970, %v2089
        %2091 = vmatmul.bf16.gmra.mxu0 %v1910
        %v2092 = vpop.f32.mrf.mxu0
        %v2093 = vadd.f32 %v1970, %v2092
        %v2094 = vpop.f32.mrf.mxu0
        %v2095 = vadd.f32 %v1970, %v2094
        %2096 = vmatmul.bf16.gmra.mxu0 %v1912
        %v2097 = vpop.f32.mrf.mxu0
        %v2098 = vadd.f32 %v1970, %v2097
        %v2099 = vpop.f32.mrf.mxu0
        %v2100 = vadd.f32 %v1970, %v2099
        %2101 = vmatmul.bf16.gmra.mxu0 %v1914
        %v2102 = vpop.f32.mrf.mxu0
        %v2103 = vadd.f32 %v1970, %v2102
        %v2104 = vpop.f32.mrf.mxu0
        %v2105 = vadd.f32 %v1970, %v2104
        %2106 = vmatmul.bf16.gmra.mxu0 %v1916
        %v2107 = vpop.f32.mrf.mxu0
        %v2108 = vadd.f32 %v1970, %v2107
        %v2109 = vpop.f32.mrf.mxu0
        %v2110 = vadd.f32 %v1970, %v2109
        %2111 = vmatmul.bf16.gmra.mxu0 %v1918
        %v2112 = vpop.f32.mrf.mxu0
        %v2113 = vadd.f32 %v1970, %v2112
        %v2114 = vpop.f32.mrf.mxu0
        %v2115 = vadd.f32 %v1970, %v2114
        %2116 = vmatmul.bf16.gmra.mxu0 %v1920
        %v2117 = vpop.f32.mrf.mxu0
        %v2118 = vadd.f32 %v1970, %v2117
        %v2119 = vpop.f32.mrf.mxu0
        %v2120 = vadd.f32 %v1970, %v2119
        %2121 = vmatmul.bf16.gmra.mxu0 %v1922
        %v2122 = vpop.f32.mrf.mxu0
        %v2123 = vadd.f32 %v1970, %v2122
        %v2124 = vpop.f32.mrf.mxu0
        %v2125 = vadd.f32 %v1970, %v2124
        %2126 = vmatmul.bf16.gmra.mxu0 %v1924
        %v2127 = vpop.f32.mrf.mxu0
        %v2128 = vadd.f32 %v1970, %v2127
        %v2129 = vpop.f32.mrf.mxu0
        %v2130 = vadd.f32 %v1970, %v2129
        %2131 = vmatmul.bf16.gmra.mxu0 %v1926
        %v2132 = vpop.f32.mrf.mxu0
        %v2133 = vadd.f32 %v1970, %v2132
        %v2134 = vpop.f32.mrf.mxu0
        %v2135 = vadd.f32 %v1970, %v2134
        %2136 = vmatmul.bf16.gmra.mxu0 %v1928
        %v2137 = vpop.f32.mrf.mxu0
        %v2138 = vadd.f32 %v1970, %v2137
        %v2139 = vpop.f32.mrf.mxu0
        %v2140 = vadd.f32 %v1970, %v2139
        %2141 = vmatmul.bf16.gmra.mxu0 %v1930
        %v2142 = vpop.f32.mrf.mxu0
        %v2143 = vadd.f32 %v1970, %v2142
        %v2144 = vpop.f32.mrf.mxu0
        %v2145 = vadd.f32 %v1970, %v2144
        %2146 = vmatmul.bf16.gmra.mxu0 %v1932
        %v2147 = vpop.f32.mrf.mxu0
        %v2148 = vadd.f32 %v1970, %v2147
        %v2149 = vpop.f32.mrf.mxu0
        %v2150 = vadd.f32 %v1970, %v2149
        %2151 = vmatmul.bf16.gmra.mxu0 %v1934
        %v2152 = vpop.f32.mrf.mxu0
        %v2153 = vadd.f32 %v1970, %v2152
        %v2154 = vpop.f32.mrf.mxu0
        %v2155 = vadd.f32 %v1970, %v2154
        %2156 = vdwg.mxu0
        %2157 = vmatpush.bf16.msra.mxu0 %v2051
        %2158 = vmatpush.bf16.msra.mxu0 %v2050
        %2159 = vmatpush.bf16.msra.mxu0 %v2049
        %2160 = vmatpush.bf16.msra.mxu0 %v2048
        %2161 = vmatpush.bf16.msra.mxu0 %v2047
        %2162 = vmatpush.bf16.msra.mxu0 %v2046
        %2163 = vmatpush.bf16.msra.mxu0 %v2045
        %2164 = vmatpush.bf16.msra.mxu0 %v2044
        %2165 = vmatmul.bf16.gmra.mxu0 %v1905
        %v2166 = vpop.f32.mrf.mxu0
        %v2167 = vadd.f32 %v2078, %v2166
        %v2168 = vpop.f32.mrf.mxu0
        %v2169 = vadd.f32 %v2080, %v2168
        %2170 = vmatmul.bf16.gmra.mxu0 %v1907
        %v2171 = vpop.f32.mrf.mxu0
        %v2172 = vadd.f32 %v2083, %v2171
        %v2173 = vpop.f32.mrf.mxu0
        %v2174 = vadd.f32 %v2085, %v2173
        %2175 = vmatmul.bf16.gmra.mxu0 %v1909
        %v2176 = vpop.f32.mrf.mxu0
        %v2177 = vadd.f32 %v2088, %v2176
        %v2178 = vpop.f32.mrf.mxu0
        %v2179 = vadd.f32 %v2090, %v2178
        %2180 = vmatmul.bf16.gmra.mxu0 %v1911
        %v2181 = vpop.f32.mrf.mxu0
        %v2182 = vadd.f32 %v2093, %v2181
        %v2183 = vpop.f32.mrf.mxu0
        %v2184 = vadd.f32 %v2095, %v2183
        %2185 = vmatmul.bf16.gmra.mxu0 %v1913
        %v2186 = vpop.f32.mrf.mxu0
        %v2187 = vadd.f32 %v2098, %v2186
        %v2188 = vpop.f32.mrf.mxu0
        %v2189 = vadd.f32 %v2100, %v2188
        %2190 = vmatmul.bf16.gmra.mxu0 %v1915
        %v2191 = vpop.f32.mrf.mxu0
        %v2192 = vadd.f32 %v2103, %v2191
        %v2193 = vpop.f32.mrf.mxu0
        %v2194 = vadd.f32 %v2105, %v2193
        %2195 = vmatmul.bf16.gmra.mxu0 %v1917
        %v2196 = vpop.f32.mrf.mxu0
        %v2197 = vadd.f32 %v2108, %v2196
        %v2198 = vpop.f32.mrf.mxu0
        %v2199 = vadd.f32 %v2110, %v2198
        %2200 = vmatmul.bf16.gmra.mxu0 %v1919
        %v2201 = vpop.f32.mrf.mxu0
        %v2202 = vadd.f32 %v2113, %v2201
        %v2203 = vpop.f32.mrf.mxu0
        %v2204 = vadd.f32 %v2115, %v2203
        %2205 = vmatmul.bf16.gmra.mxu0 %v1921
        %v2206 = vpop.f32.mrf.mxu0
        %v2207 = vadd.f32 %v2118, %v2206
        %v2208 = vpop.f32.mrf.mxu0
        %v2209 = vadd.f32 %v2120, %v2208
        %2210 = vmatmul.bf16.gmra.mxu0 %v1923
        %v2211 = vpop.f32.mrf.mxu0
        %v2212 = vadd.f32 %v2123, %v2211
        %v2213 = vpop.f32.mrf.mxu0
        %v2214 = vadd.f32 %v2125, %v2213
        %2215 = vmatmul.bf16.gmra.mxu0 %v1925
        %v2216 = vpop.f32.mrf.mxu0
        %v2217 = vadd.f32 %v2128, %v2216
        %v2218 = vpop.f32.mrf.mxu0
        %v2219 = vadd.f32 %v2130, %v2218
        %2220 = vmatmul.bf16.gmra.mxu0 %v1927
        %v2221 = vpop.f32.mrf.mxu0
        %v2222 = vadd.f32 %v2133, %v2221
        %v2223 = vpop.f32.mrf.mxu0
        %v2224 = vadd.f32 %v2135, %v2223
        %2225 = vmatmul.bf16.gmra.mxu0 %v1929
        %v2226 = vpop.f32.mrf.mxu0
        %v2227 = vadd.f32 %v2138, %v2226
        %v2228 = vpop.f32.mrf.mxu0
        %v2229 = vadd.f32 %v2140, %v2228
        %2230 = vmatmul.bf16.gmra.mxu0 %v1931
        %v2231 = vpop.f32.mrf.mxu0
        %v2232 = vadd.f32 %v2143, %v2231
        %v2233 = vpop.f32.mrf.mxu0
        %v2234 = vadd.f32 %v2145, %v2233
        %2235 = vmatmul.bf16.gmra.mxu0 %v1933
        %v2236 = vpop.f32.mrf.mxu0
        %v2237 = vadd.f32 %v2148, %v2236
        %v2238 = vpop.f32.mrf.mxu0
        %v2239 = vadd.f32 %v2150, %v2238
        %2240 = vmatmul.bf16.gmra.mxu0 %v1935
        %v2241 = vpop.f32.mrf.mxu0
        %v2242 = vadd.f32 %v2153, %v2241
        %v2243 = vpop.f32.mrf.mxu0
        %v2244 = vadd.f32 %v2155, %v2243
        %2245 = vdwg.mxu0
        %v2246 = vmax.f32 %v2167, 0.0
        %v2247 = vmax.f32 %v2169, 0.0
        %v2248 = vmax.f32 %v2172, 0.0
        %v2249 = vmax.f32 %v2174, 0.0
        %v2250 = vmax.f32 %v2177, 0.0
        %v2251 = vmax.f32 %v2179, 0.0
        %v2252 = vmax.f32 %v2182, 0.0
        %v2253 = vmax.f32 %v2184, 0.0
        %v2254 = vmax.f32 %v2187, 0.0
        %v2255 = vmax.f32 %v2189, 0.0
        %v2256 = vmax.f32 %v2192, 0.0
        %v2257 = vmax.f32 %v2194, 0.0
        %v2258 = vmax.f32 %v2197, 0.0
        %v2259 = vmax.f32 %v2199, 0.0
        %v2260 = vmax.f32 %v2202, 0.0
        %v2261 = vmax.f32 %v2204, 0.0
        %v2262 = vmax.f32 %v2207, 0.0
        %v2263 = vmax.f32 %v2209, 0.0
        %v2264 = vmax.f32 %v2212, 0.0
        %v2265 = vmax.f32 %v2214, 0.0
        %v2266 = vmax.f32 %v2217, 0.0
        %v2267 = vmax.f32 %v2219, 0.0
        %v2268 = vmax.f32 %v2222, 0.0
        %v2269 = vmax.f32 %v2224, 0.0
        %v2270 = vmax.f32 %v2227, 0.0
        %v2271 = vmax.f32 %v2229, 0.0
        %v2272 = vmax.f32 %v2232, 0.0
        %v2273 = vmax.f32 %v2234, 0.0
        %v2274 = vmax.f32 %v2237, 0.0
        %v2275 = vmax.f32 %v2239, 0.0
        %v2276 = vmax.f32 %v2242, 0.0
        %v2277 = vmax.f32 %v2244, 0.0
        %v2278 = vpack.c.bf16 %v2247, %v2246
        %v2279 = vpack.c.bf16 %v2249, %v2248
        %v2280 = vpack.c.bf16 %v2251, %v2250
        %v2281 = vpack.c.bf16 %v2253, %v2252
        %v2282 = vpack.c.bf16 %v2255, %v2254
        %v2283 = vpack.c.bf16 %v2257, %v2256
        %v2284 = vpack.c.bf16 %v2259, %v2258
        %v2285 = vpack.c.bf16 %v2261, %v2260
        %v2286 = vpack.c.bf16 %v2263, %v2262
        %v2287 = vpack.c.bf16 %v2265, %v2264
        %v2288 = vpack.c.bf16 %v2267, %v2266
        %v2289 = vpack.c.bf16 %v2269, %v2268
        %v2290 = vpack.c.bf16 %v2271, %v2270
        %v2291 = vpack.c.bf16 %v2273, %v2272
        %v2292 = vpack.c.bf16 %v2275, %v2274
        %v2293 = vpack.c.bf16 %v2277, %v2276
        %v2294 = vld [vmem:[#allocation13] sm:$0xf]
        %v2295 = vld [vmem:[#allocation13 + $0x4] sm:$0xf]
        %v2296 = vld [vmem:[#allocation13 + $0x8] sm:$0xf]
        %v2297 = vld [vmem:[#allocation13 + $0xc] sm:$0xf]
        %v2298 = vld [vmem:[#allocation13 + $0x10] sm:$0xf]
        %v2299 = vld [vmem:[#allocation13 + $0x14] sm:$0xf]
        %v2300 = vld [vmem:[#allocation13 + $0x18] sm:$0xf]
        %v2301 = vld [vmem:[#allocation13 + $0x1c] sm:$0xf]
        %v2302 = vld [vmem:[#allocation13 + $0x20] sm:$0xf]
        %v2303 = vld [vmem:[#allocation13 + $0x24] sm:$0xf]
        %v2304 = vld [vmem:[#allocation13 + $0x28] sm:$0xf]
        %v2305 = vld [vmem:[#allocation13 + $0x2c] sm:$0xf]
        %v2306 = vld [vmem:[#allocation13 + $0x30] sm:$0xf]
        %v2307 = vld [vmem:[#allocation13 + $0x34] sm:$0xf]
        %v2308 = vld [vmem:[#allocation13 + $0x38] sm:$0xf]
        %v2309 = vld [vmem:[#allocation13 + $0x3c] sm:$0xf]
        %v2310 = vld [vmem:[%s10] sm:$0x1]
        %v2312 = vperm.slane %v2310, 0
        %v2330 = vunpack.c.l.b16 %v2294
        %v2331 = vunpack.c.l.b16 %v2295
        %v2332 = vunpack.c.l.b16 %v2296
        %v2333 = vunpack.c.l.b16 %v2297
        %v2334 = vunpack.c.l.b16 %v2298
        %v2335 = vunpack.c.l.b16 %v2299
        %v2336 = vunpack.c.l.b16 %v2300
        %v2337 = vunpack.c.l.b16 %v2301
        %v2338 = vunpack.c.l.b16 %v2302
        %v2339 = vunpack.c.l.b16 %v2303
        %v2340 = vunpack.c.l.b16 %v2304
        %v2341 = vunpack.c.l.b16 %v2305
        %v2342 = vunpack.c.l.b16 %v2306
        %v2343 = vunpack.c.l.b16 %v2307
        %v2344 = vunpack.c.l.b16 %v2308
        %v2345 = vunpack.c.l.b16 %v2309
        %v2346 = vpack.c.b16 %v2331, %v2330
        %v2347 = vpack.c.b16 %v2333, %v2332
        %v2348 = vpack.c.b16 %v2335, %v2334
        %v2349 = vpack.c.b16 %v2337, %v2336
        %v2350 = vpack.c.b16 %v2339, %v2338
        %v2351 = vpack.c.b16 %v2341, %v2340
        %v2352 = vpack.c.b16 %v2343, %v2342
        %v2353 = vpack.c.b16 %v2345, %v2344
        %2362 = vmatpush.bf16.msra.mxu0 %v2353
        %2363 = vmatpush.bf16.msra.mxu0 %v2352
        %2364 = vmatpush.bf16.msra.mxu0 %v2351
        %2365 = vmatpush.bf16.msra.mxu0 %v2350
        %2366 = vmatpush.bf16.msra.mxu0 %v2349
        %2367 = vmatpush.bf16.msra.mxu0 %v2348
        %2368 = vmatpush.bf16.msra.mxu0 %v2347
        %2369 = vmatpush.bf16.msra.mxu0 %v2346
        %2370 = vmatmul.bf16.gmra.mxu0 %v2278
        %v2371 = vpop.f32.mrf.mxu0
        %v2372 = vadd.f32 %v2312, %v2371
        %v2373 = vpop.f32.mrf.mxu0
        %v2374 = vadd.f32 %v2312, %v2373
        %2375 = vmatmul.bf16.gmra.mxu0 %v2279
        %v2376 = vpop.f32.mrf.mxu0
        %v2377 = vadd.f32 %v2312, %v2376
        %v2378 = vpop.f32.mrf.mxu0
        %v2379 = vadd.f32 %v2312, %v2378
        %2380 = vmatmul.bf16.gmra.mxu0 %v2280
        %v2381 = vpop.f32.mrf.mxu0
        %v2382 = vadd.f32 %v2312, %v2381
        %v2383 = vpop.f32.mrf.mxu0
        %v2384 = vadd.f32 %v2312, %v2383
        %2385 = vmatmul.bf16.gmra.mxu0 %v2281
        %v2386 = vpop.f32.mrf.mxu0
        %v2387 = vadd.f32 %v2312, %v2386
        %v2388 = vpop.f32.mrf.mxu0
        %v2389 = vadd.f32 %v2312, %v2388
        %2390 = vmatmul.bf16.gmra.mxu0 %v2282
        %v2391 = vpop.f32.mrf.mxu0
        %v2392 = vadd.f32 %v2312, %v2391
        %v2393 = vpop.f32.mrf.mxu0
        %v2394 = vadd.f32 %v2312, %v2393
        %2395 = vmatmul.bf16.gmra.mxu0 %v2283
        %v2396 = vpop.f32.mrf.mxu0
        %v2397 = vadd.f32 %v2312, %v2396
        %v2398 = vpop.f32.mrf.mxu0
        %v2399 = vadd.f32 %v2312, %v2398
        %2400 = vmatmul.bf16.gmra.mxu0 %v2284
        %v2401 = vpop.f32.mrf.mxu0
        %v2402 = vadd.f32 %v2312, %v2401
        %v2403 = vpop.f32.mrf.mxu0
        %v2404 = vadd.f32 %v2312, %v2403
        %2405 = vmatmul.bf16.gmra.mxu0 %v2285
        %v2406 = vpop.f32.mrf.mxu0
        %v2407 = vadd.f32 %v2312, %v2406
        %v2408 = vpop.f32.mrf.mxu0
        %v2409 = vadd.f32 %v2312, %v2408
        %2410 = vmatmul.bf16.gmra.mxu0 %v2286
        %v2411 = vpop.f32.mrf.mxu0
        %v2412 = vadd.f32 %v2312, %v2411
        %v2413 = vpop.f32.mrf.mxu0
        %v2414 = vadd.f32 %v2312, %v2413
        %2415 = vmatmul.bf16.gmra.mxu0 %v2287
        %v2416 = vpop.f32.mrf.mxu0
        %v2417 = vadd.f32 %v2312, %v2416
        %v2418 = vpop.f32.mrf.mxu0
        %v2419 = vadd.f32 %v2312, %v2418
        %2420 = vmatmul.bf16.gmra.mxu0 %v2288
        %v2421 = vpop.f32.mrf.mxu0
        %v2422 = vadd.f32 %v2312, %v2421
        %v2423 = vpop.f32.mrf.mxu0
        %v2424 = vadd.f32 %v2312, %v2423
        %2425 = vmatmul.bf16.gmra.mxu0 %v2289
        %v2426 = vpop.f32.mrf.mxu0
        %v2427 = vadd.f32 %v2312, %v2426
        %v2428 = vpop.f32.mrf.mxu0
        %v2429 = vadd.f32 %v2312, %v2428
        %2430 = vmatmul.bf16.gmra.mxu0 %v2290
        %v2431 = vpop.f32.mrf.mxu0
        %v2432 = vadd.f32 %v2312, %v2431
        %v2433 = vpop.f32.mrf.mxu0
        %v2434 = vadd.f32 %v2312, %v2433
        %2435 = vmatmul.bf16.gmra.mxu0 %v2291
        %v2436 = vpop.f32.mrf.mxu0
        %v2437 = vadd.f32 %v2312, %v2436
        %v2438 = vpop.f32.mrf.mxu0
        %v2439 = vadd.f32 %v2312, %v2438
        %2440 = vmatmul.bf16.gmra.mxu0 %v2292
        %v2441 = vpop.f32.mrf.mxu0
        %v2442 = vadd.f32 %v2312, %v2441
        %v2443 = vpop.f32.mrf.mxu0
        %v2444 = vadd.f32 %v2312, %v2443
        %2445 = vmatmul.bf16.gmra.mxu0 %v2293
        %v2446 = vpop.f32.mrf.mxu0
        %v2447 = vadd.f32 %v2312, %v2446
        %v2448 = vpop.f32.mrf.mxu0
        %v2449 = vadd.f32 %v2312, %v2448
        %2450 = vdwg.mxu0
        %v2451 = vmax.f32 %v2372, 0.0
        %v2452 = vmax.f32 %v2374, 0.0
        %v2453 = vmax.f32 %v2377, 0.0
        %v2454 = vmax.f32 %v2379, 0.0
        %v2455 = vmax.f32 %v2382, 0.0
        %v2456 = vmax.f32 %v2384, 0.0
        %v2457 = vmax.f32 %v2387, 0.0
        %v2458 = vmax.f32 %v2389, 0.0
        %v2459 = vmax.f32 %v2392, 0.0
        %v2460 = vmax.f32 %v2394, 0.0
        %v2461 = vmax.f32 %v2397, 0.0
        %v2462 = vmax.f32 %v2399, 0.0
        %v2463 = vmax.f32 %v2402, 0.0
        %v2464 = vmax.f32 %v2404, 0.0
        %v2465 = vmax.f32 %v2407, 0.0
        %v2466 = vmax.f32 %v2409, 0.0
        %v2467 = vmax.f32 %v2412, 0.0
        %v2468 = vmax.f32 %v2414, 0.0
        %v2469 = vmax.f32 %v2417, 0.0
        %v2470 = vmax.f32 %v2419, 0.0
        %v2471 = vmax.f32 %v2422, 0.0
        %v2472 = vmax.f32 %v2424, 0.0
        %v2473 = vmax.f32 %v2427, 0.0
        %v2474 = vmax.f32 %v2429, 0.0
        %v2475 = vmax.f32 %v2432, 0.0
        %v2476 = vmax.f32 %v2434, 0.0
        %v2477 = vmax.f32 %v2437, 0.0
        %v2478 = vmax.f32 %v2439, 0.0
        %v2479 = vmax.f32 %v2442, 0.0
        %v2480 = vmax.f32 %v2444, 0.0
        %v2481 = vmax.f32 %v2447, 0.0
        %v2482 = vmax.f32 %v2449, 0.0
        %v2483 = vpack.c.bf16 %v2452, %v2451
        %v2484 = vpack.c.bf16 %v2454, %v2453
        %v2485 = vpack.c.bf16 %v2456, %v2455
        %v2486 = vpack.c.bf16 %v2458, %v2457
        %v2487 = vpack.c.bf16 %v2460, %v2459
        %v2488 = vpack.c.bf16 %v2462, %v2461
        %v2489 = vpack.c.bf16 %v2464, %v2463
        %v2490 = vpack.c.bf16 %v2466, %v2465
        %v2491 = vpack.c.bf16 %v2468, %v2467
        %v2492 = vpack.c.bf16 %v2470, %v2469
        %v2493 = vpack.c.bf16 %v2472, %v2471
        %v2494 = vpack.c.bf16 %v2474, %v2473
        %v2495 = vpack.c.bf16 %v2476, %v2475
        %v2496 = vpack.c.bf16 %v2478, %v2477
        %v2497 = vpack.c.bf16 %v2480, %v2479
        %v2498 = vpack.c.bf16 %v2482, %v2481
        %v2499 = vld [vmem:[#allocation14] sm:$0xf]
        %v2500 = vld [vmem:[#allocation14 + $0x4] sm:$0xf]
        %v2501 = vld [vmem:[#allocation14 + $0x8] sm:$0xf]
        %v2502 = vld [vmem:[#allocation14 + $0xc] sm:$0xf]
        %v2503 = vld [vmem:[#allocation14 + $0x10] sm:$0xf]
        %v2504 = vld [vmem:[#allocation14 + $0x14] sm:$0xf]
        %v2505 = vld [vmem:[#allocation14 + $0x18] sm:$0xf]
        %v2506 = vld [vmem:[#allocation14 + $0x1c] sm:$0xf]
        %v2507 = vld [vmem:[#allocation14 + $0x20] sm:$0xf]
        %v2508 = vld [vmem:[#allocation14 + $0x24] sm:$0xf]
        %v2509 = vld [vmem:[#allocation14 + $0x28] sm:$0xf]
        %v2510 = vld [vmem:[#allocation14 + $0x2c] sm:$0xf]
        %v2511 = vld [vmem:[#allocation14 + $0x30] sm:$0xf]
        %v2512 = vld [vmem:[#allocation14 + $0x34] sm:$0xf]
        %v2513 = vld [vmem:[#allocation14 + $0x38] sm:$0xf]
        %v2514 = vld [vmem:[#allocation14 + $0x3c] sm:$0xf]
        %v2515 = vld [vmem:[%s12] sm:$0x1]
        %v2517 = vperm.slane %v2515, 0
        %v2535 = vunpack.c.l.b16 %v2499
        %v2536 = vunpack.c.l.b16 %v2500
        %v2537 = vunpack.c.l.b16 %v2501
        %v2538 = vunpack.c.l.b16 %v2502
        %v2539 = vunpack.c.l.b16 %v2503
        %v2540 = vunpack.c.l.b16 %v2504
        %v2541 = vunpack.c.l.b16 %v2505
        %v2542 = vunpack.c.l.b16 %v2506
        %v2543 = vunpack.c.l.b16 %v2507
        %v2544 = vunpack.c.l.b16 %v2508
        %v2545 = vunpack.c.l.b16 %v2509
        %v2546 = vunpack.c.l.b16 %v2510
        %v2547 = vunpack.c.l.b16 %v2511
        %v2548 = vunpack.c.l.b16 %v2512
        %v2549 = vunpack.c.l.b16 %v2513
        %v2550 = vunpack.c.l.b16 %v2514
        %v2551 = vpack.c.b16 %v2536, %v2535
        %v2552 = vpack.c.b16 %v2538, %v2537
        %v2553 = vpack.c.b16 %v2540, %v2539
        %v2554 = vpack.c.b16 %v2542, %v2541
        %v2555 = vpack.c.b16 %v2544, %v2543
        %v2556 = vpack.c.b16 %v2546, %v2545
        %v2557 = vpack.c.b16 %v2548, %v2547
        %v2558 = vpack.c.b16 %v2550, %v2549
        %2567 = vmatpush.bf16.msra.mxu0 %v2558
        %2568 = vmatpush.bf16.msra.mxu0 %v2557
        %2569 = vmatpush.bf16.msra.mxu0 %v2556
        %2570 = vmatpush.bf16.msra.mxu0 %v2555
        %2571 = vmatpush.bf16.msra.mxu0 %v2554
        %2572 = vmatpush.bf16.msra.mxu0 %v2553
        %2573 = vmatpush.bf16.msra.mxu0 %v2552
        %2574 = vmatpush.bf16.msra.mxu0 %v2551
        %2575 = vmatmul.bf16.gmra.mxu0 %v2483
        %v2576 = vpop.f32.mrf.mxu0
        %v2577 = vadd.f32 %v2517, %v2576
        %v2578 = vpop.f32.mrf.mxu0
        %v2579 = vadd.f32 %v2517, %v2578
        %2580 = vmatmul.bf16.gmra.mxu0 %v2484
        %v2581 = vpop.f32.mrf.mxu0
        %v2582 = vadd.f32 %v2517, %v2581
        %v2583 = vpop.f32.mrf.mxu0
        %v2584 = vadd.f32 %v2517, %v2583
        %2585 = vmatmul.bf16.gmra.mxu0 %v2485
        %v2586 = vpop.f32.mrf.mxu0
        %v2587 = vadd.f32 %v2517, %v2586
        %v2588 = vpop.f32.mrf.mxu0
        %v2589 = vadd.f32 %v2517, %v2588
        %2590 = vmatmul.bf16.gmra.mxu0 %v2486
        %v2591 = vpop.f32.mrf.mxu0
        %v2592 = vadd.f32 %v2517, %v2591
        %v2593 = vpop.f32.mrf.mxu0
        %v2594 = vadd.f32 %v2517, %v2593
        %2595 = vmatmul.bf16.gmra.mxu0 %v2487
        %v2596 = vpop.f32.mrf.mxu0
        %v2597 = vadd.f32 %v2517, %v2596
        %v2598 = vpop.f32.mrf.mxu0
        %v2599 = vadd.f32 %v2517, %v2598
        %2600 = vmatmul.bf16.gmra.mxu0 %v2488
        %v2601 = vpop.f32.mrf.mxu0
        %v2602 = vadd.f32 %v2517, %v2601
        %v2603 = vpop.f32.mrf.mxu0
        %v2604 = vadd.f32 %v2517, %v2603
        %2605 = vmatmul.bf16.gmra.mxu0 %v2489
        %v2606 = vpop.f32.mrf.mxu0
        %v2607 = vadd.f32 %v2517, %v2606
        %v2608 = vpop.f32.mrf.mxu0
        %v2609 = vadd.f32 %v2517, %v2608
        %2610 = vmatmul.bf16.gmra.mxu0 %v2490
        %v2611 = vpop.f32.mrf.mxu0
        %v2612 = vadd.f32 %v2517, %v2611
        %v2613 = vpop.f32.mrf.mxu0
        %v2614 = vadd.f32 %v2517, %v2613
        %2615 = vmatmul.bf16.gmra.mxu0 %v2491
        %v2616 = vpop.f32.mrf.mxu0
        %v2617 = vadd.f32 %v2517, %v2616
        %v2618 = vpop.f32.mrf.mxu0
        %v2619 = vadd.f32 %v2517, %v2618
        %2620 = vmatmul.bf16.gmra.mxu0 %v2492
        %v2621 = vpop.f32.mrf.mxu0
        %v2622 = vadd.f32 %v2517, %v2621
        %v2623 = vpop.f32.mrf.mxu0
        %v2624 = vadd.f32 %v2517, %v2623
        %2625 = vmatmul.bf16.gmra.mxu0 %v2493
        %v2626 = vpop.f32.mrf.mxu0
        %v2627 = vadd.f32 %v2517, %v2626
        %v2628 = vpop.f32.mrf.mxu0
        %v2629 = vadd.f32 %v2517, %v2628
        %2630 = vmatmul.bf16.gmra.mxu0 %v2494
        %v2631 = vpop.f32.mrf.mxu0
        %v2632 = vadd.f32 %v2517, %v2631
        %v2633 = vpop.f32.mrf.mxu0
        %v2634 = vadd.f32 %v2517, %v2633
        %2635 = vmatmul.bf16.gmra.mxu0 %v2495
        %v2636 = vpop.f32.mrf.mxu0
        %v2637 = vadd.f32 %v2517, %v2636
        %v2638 = vpop.f32.mrf.mxu0
        %v2639 = vadd.f32 %v2517, %v2638
        %2640 = vmatmul.bf16.gmra.mxu0 %v2496
        %v2641 = vpop.f32.mrf.mxu0
        %v2642 = vadd.f32 %v2517, %v2641
        %v2643 = vpop.f32.mrf.mxu0
        %v2644 = vadd.f32 %v2517, %v2643
        %2645 = vmatmul.bf16.gmra.mxu0 %v2497
        %v2646 = vpop.f32.mrf.mxu0
        %v2647 = vadd.f32 %v2517, %v2646
        %v2648 = vpop.f32.mrf.mxu0
        %v2649 = vadd.f32 %v2517, %v2648
        %2650 = vmatmul.bf16.gmra.mxu0 %v2498
        %v2651 = vpop.f32.mrf.mxu0
        %v2652 = vadd.f32 %v2517, %v2651
        %v2653 = vpop.f32.mrf.mxu0
        %v2654 = vadd.f32 %v2517, %v2653
        %2655 = vdwg.mxu0
        %2656 = vst [vmem:[%s574] sm:$0xff] %v2577
        %2657 = vst [vmem:[%s574 + $0x8] sm:$0xff] %v2579
        %2658 = vst [vmem:[%s574 + $0x10] sm:$0xff] %v2582
        %2659 = vst [vmem:[%s574 + $0x18] sm:$0xff] %v2584
        %2660 = vst [vmem:[%s574 + $0x20] sm:$0xff] %v2587
        %2661 = vst [vmem:[%s574 + $0x28] sm:$0xff] %v2589
        %2662 = vst [vmem:[%s574 + $0x30] sm:$0xff] %v2592
        %2663 = vst [vmem:[%s574 + $0x38] sm:$0xff] %v2594
        %2664 = vst [vmem:[%s574 + $0x40] sm:$0xff] %v2597
        %2665 = vst [vmem:[%s574 + $0x48] sm:$0xff] %v2599
        %2666 = vst [vmem:[%s574 + $0x50] sm:$0xff] %v2602
        %2667 = vst [vmem:[%s574 + $0x58] sm:$0xff] %v2604
        %2668 = vst [vmem:[%s574 + $0x60] sm:$0xff] %v2607
        %2669 = vst [vmem:[%s574 + $0x68] sm:$0xff] %v2609
        %2670 = vst [vmem:[%s574 + $0x70] sm:$0xff] %v2612
        %2671 = vst [vmem:[%s574 + $0x78] sm:$0xff] %v2614
        %2672 = vst [vmem:[%s574 + $0x80] sm:$0xff] %v2617
        %2673 = vst [vmem:[%s574 + $0x88] sm:$0xff] %v2619
        %2674 = vst [vmem:[%s574 + $0x90] sm:$0xff] %v2622
        %2675 = vst [vmem:[%s574 + $0x98] sm:$0xff] %v2624
        %2676 = vst [vmem:[%s574 + $0xa0] sm:$0xff] %v2627
        %2677 = vst [vmem:[%s574 + $0xa8] sm:$0xff] %v2629
        %2678 = vst [vmem:[%s574 + $0xb0] sm:$0xff] %v2632
        %2679 = vst [vmem:[%s574 + $0xb8] sm:$0xff] %v2634
        %2680 = vst [vmem:[%s574 + $0xc0] sm:$0xff] %v2637
        %2681 = vst [vmem:[%s574 + $0xc8] sm:$0xff] %v2639
        %2682 = vst [vmem:[%s574 + $0xd0] sm:$0xff] %v2642
        %2683 = vst [vmem:[%s574 + $0xd8] sm:$0xff] %v2644
        %2684 = vst [vmem:[%s574 + $0xe0] sm:$0xff] %v2647
        %2685 = vst [vmem:[%s574 + $0xe8] sm:$0xff] %v2649
        %2686 = vst [vmem:[%s574 + $0xf0] sm:$0xff] %v2652
        %2687 = vst [vmem:[%s574 + $0xf8] sm:$0xff] %v2654
        %s2688 = sand.u32 %s320, 1
        %s2689 = scalar_lea.sflag [#allocation4], %s2688
        %s2690 = sand.u32 %s320, 1
        %s2691 = smul.addr %s2690, 256
        %s2692 = scalar_lea.vmem [#allocation16], %s2691
        // Predicated region
        $region105: #{tpu_custom_call.1} parent=71 // pred_check
          %p2693 = pneg %p330
        $region106: #{tpu_custom_call.1} parent=71 // pred_check_branch
          %2695 = sbr.rel (%p2693) target = $region108
        $region107: #{tpu_custom_call.1} parent=71 // pred_region
          %s2696 = smul.u32 32, %s34
          %2698 = vsyncadd %s2689, 0
          %s2699 = smul.addr %s2696, 8
          %s2700 = scalar_lea.hbm %s13, %s2699
          %s2701 = sshll.u32 %s2692, 4
          %s2702 = int_to_ptr.vmem [resolvable:$true] %s2701
          %s2703 = sshll.u32 %s2700, 4
          %s2704 = int_to_ptr.hbm [resolvable:$true] %s2703
          %2709 = dma.vmem_to_hbm [thread:$0]  %s2702, 4096, %s2704, %s2689, 128, 128, 8
        $region108: #{tpu_custom_call.1} parent=71 // pred_fallthru
          _
      $region72: #{tpu_custom_call.1} parent=5 // pred_fallthru
        _
      %p2710 = scmp.le.s32.totalorder 2, %s29
      // Predicated region
      $region109: #{tpu_custom_call.1} parent=5 // pred_check
        %p2711 = pneg %p2710
      $region110: #{tpu_custom_call.1} parent=5 // pred_check_branch
        %2713 = sbr.rel (%p2711) target = $region112
      $region111: #{tpu_custom_call.1} parent=5 // pred_region
        %s2714 = ssub.s32 %s29, 2
        // Predicated region
        $region113: #{tpu_custom_call.1} parent=111 // pred_check
          %p2715 = pneg %p336
        $region114: #{tpu_custom_call.1} parent=111 // pred_check_branch
          %2717 = sbr.rel (%p2715) target = $region116
        $region115: #{tpu_custom_call.1} parent=111 // pred_region
          %s2718 = sand.u32 %s321, 1
          %s2719 = scalar_lea.sflag [#allocation4], %s2718
          %s2720 = sand.u32 %s321, 1
          %s2721 = smul.addr %s2720, 256
          %s2722 = scalar_lea.vmem [#allocation16], %s2721
          %2724 = dma.done %s2719, 4096
        $region116: #{tpu_custom_call.1} parent=111 // pred_fallthru
          _
      $region112: #{tpu_custom_call.1} parent=5 // pred_fallthru
        _
    $region6: #{tpu_custom_call.1} parent=1 // loop_footer
      %s33 = sadd.s32 1, %s29
    $region7: #{tpu_custom_call.1} parent=1 // loop_footer_branch
      %28 = sbr.rel target = $region3
    $region8: #{tpu_custom_call.1} parent=1 // loop_exit
      _
    %2725 = vsyncpa [#allocation3], 1
    %s2726 = scalar_lea.sflag [#allocation3], 1
    %2727 = vsyncpa %s2726, 1
    %2728 = vsyncpa [#allocation6], 1
    %2729 = vsyncpa [#allocation9], 1
    %2730 = vsyncpa [#allocation12], 1
    %2731 = vsyncpa [#allocation15], 1
    %2732 = vsyncpa [#allocation4], 1
    %s2733 = scalar_lea.sflag [#allocation4], 1
    %2734 = vsyncpa %s2733, 1

</llo_original>
